<compile_context>
chip_gen: v5e
topology: v5e:2x2
jax: 0.10.0
libtpu: 0.0.40
codegen_flags: <defaults>
</compile_context>

<pallas_src>
import functools

import jax
import jax.numpy as jnp
from jax.experimental import pallas as pl
from jax.experimental.pallas import tpu as pltpu

LANES = 128


def _round_up(x, m):
    return (x + m - 1) // m * m


def _hw_tile(hw):
    # Spatial reduction tile; kept small enough that double-buffered bf16/f32
    # tiles stay far below v7x's 64 MiB VMEM (32 MiB scoped default).
    if hw >= 2048:
        return 512
    if hw >= 256:
        return 128
    return _round_up(hw, 16)


# ----------------------------------------------------------------------------
# Shared in-kernel pieces
# ----------------------------------------------------------------------------
def _conv_silu_block(p_ref, wc_ref, bc_ref):
    # (N, THW, K) bf16 x (K, CP) bf16 -> (N, THW, CP) f32 on the MXU.
    y = jax.lax.dot_general(
        p_ref[...], wc_ref[...],
        dimension_numbers=(((2,), (0,)), ((), ())),
        preferred_element_type=jnp.float32)
    y = y + bc_ref[...]            # bias exactly once per output element
    return y * jax.nn.sigmoid(y)   # SiLU in f32 (no bf16 EUP on v5e)


def _pool_accumulate(y, acc_ref, t, hw, thw):
    if hw % thw != 0:              # static: mask zero-padded spatial rows
        row = jax.lax.broadcasted_iota(jnp.int32, (1, thw, 1), 1) + t * thw
        y = jnp.where(row < hw, y, 0.0)
    acc_ref[...] += jnp.sum(y, axis=1)     # per-image running channel sums


def _classify(acc_ref, wf_ref, bf_ref, o_ref, inv_hw):
    pooled = acc_ref[...] * inv_hw          # mean = sum * (1/HW)
    logits = jnp.dot(pooled, wf_ref[...], preferred_element_type=jnp.float32)
    o_ref[...] = logits + bf_ref[...]


# ----------------------------------------------------------------------------
# Kernel A (hot path, features=False):
# conv(im2col matmul) + bias + SiLU + global-average-pool + classifier, fused.
# Grid axis = HW tiles (reduction for the pool) -> "arbitrary".
# ----------------------------------------------------------------------------
def fused_conv_pool_cls_kernel(p_ref, wc_ref, bc_ref, wf_ref, bf_ref,
                               o_ref, acc_ref, *, hw, inv_hw):
    t = pl.program_id(0)

    @pl.when(t == 0)
    def _init():
        acc_ref[...] = jnp.zeros_like(acc_ref)

    y = _conv_silu_block(p_ref, wc_ref, bc_ref)
    _pool_accumulate(y, acc_ref, t, hw, p_ref.shape[1])

    @pl.when(t == pl.num_programs(0) - 1)
    def _finalize():
        _classify(acc_ref, wf_ref, bf_ref, o_ref, inv_hw)


# ----------------------------------------------------------------------------
# Kernel B (features=True): same as A but also streams feature-map tiles out,
# so the feature map is written to HBM exactly once and never re-read.
# ----------------------------------------------------------------------------
def fused_conv_feat_pool_cls_kernel(p_ref, wc_ref, bc_ref, wf_ref, bf_ref,
                                    feat_ref, o_ref, acc_ref, *, hw, inv_hw):
    t = pl.program_id(0)

    @pl.when(t == 0)
    def _init():
        acc_ref[...] = jnp.zeros_like(acc_ref)

    y = _conv_silu_block(p_ref, wc_ref, bc_ref)
    feat_ref[...] = y.astype(feat_ref.dtype)        # lane-dense (CP=128) store
    _pool_accumulate(y, acc_ref, t, hw, p_ref.shape[1])

    @pl.when(t == pl.num_programs(0) - 1)
    def _finalize():
        _classify(acc_ref, wf_ref, bf_ref, o_ref, inv_hw)


# ----------------------------------------------------------------------------
# Wrappers
# ----------------------------------------------------------------------------
def _im2col_3x3(x_nhwc):
    """(N, H, W, Cin) -> (N, H*W, 9*Cin), 'same' padding, kh-major/kw/Cin order."""
    N, H, W, Cin = x_nhwc.shape
    xp = jnp.pad(x_nhwc, ((0, 0), (1, 1), (1, 1), (0, 0)))
    pats = jnp.stack(
        [xp[:, i:i + H, j:j + W, :] for i in range(3) for j in range(3)], axis=3)
    return pats.reshape(N, H * W, 9 * Cin)


def _fused_forward(patches, w_conv, b_conv, w_cls, b_cls, *, hw, emit_features):
    """patches (N, HW, K) bf16 -> logits (N, NCP) f32 [, feat (N, HW_pad, CP) f32]."""
    N, _, K = patches.shape
    CP = w_conv.shape[1]
    NCP = w_cls.shape[1]
    thw = _hw_tile(hw)
    hw_pad = _round_up(hw, thw)
    if hw_pad != hw:
        patches = jnp.pad(patches, ((0, 0), (0, hw_pad - hw), (0, 0)))

    grid = (hw_pad // thw,)
    in_specs = [
        pl.BlockSpec((N, thw, K), lambda t: (0, t, 0)),
        pl.BlockSpec((K, CP), lambda t: (0, 0)),      # resident conv weight
        pl.BlockSpec((1, CP), lambda t: (0, 0)),      # resident conv bias
        pl.BlockSpec((CP, NCP), lambda t: (0, 0)),    # resident classifier W
        pl.BlockSpec((1, NCP), lambda t: (0, 0)),     # resident classifier b
    ]
    logits_spec = pl.BlockSpec((N, NCP), lambda t: (0, 0))
    logits_shape = jax.ShapeDtypeStruct((N, NCP), jnp.float32)
    scratch = [pltpu.VMEM((N, CP), jnp.float32)]
    params = pltpu.CompilerParams(
        dimension_semantics=("arbitrary",))           # pool reduction axis

    if emit_features:
        kernel = functools.partial(
            fused_conv_feat_pool_cls_kernel, hw=hw, inv_hw=1.0 / hw)
        feat, logits = pl.pallas_call(
            kernel,
            out_shape=(jax.ShapeDtypeStruct((N, hw_pad, CP), jnp.float32),
                       logits_shape),
            grid=grid,
            in_specs=in_specs,
            out_specs=(pl.BlockSpec((N, thw, CP), lambda t: (0, t, 0)),
                       logits_spec),
            scratch_shapes=scratch,
            compiler_params=params,
        )(patches, w_conv, b_conv, w_cls, b_cls)
        return logits, feat

    kernel = functools.partial(
        fused_conv_pool_cls_kernel, hw=hw, inv_hw=1.0 / hw)
    logits = pl.pallas_call(
        kernel,
        out_shape=logits_shape,
        grid=grid,
        in_specs=in_specs,
        out_specs=logits_spec,
        scratch_shapes=scratch,
        compiler_params=params,
    )(patches, w_conv, b_conv, w_cls, b_cls)
    return logits, None


class TimmModelPallas:
    """Mirrors TimmModel.forward(x, features=False, attention=False),
    attention=None, eval mode (dropout is identity)."""

    def __init__(self, in_chans=4, feat_chans=32, num_classes=10, seed=0):
        k1, k2, k3, k4 = jax.random.split(jax.random.PRNGKey(seed), 4)
        self.in_chans = in_chans
        self.feat_chans = feat_chans
        self.num_classes = num_classes
        # lane-dense padded widths (32 -> 128 channels, 10 -> 128 classes)
        self.cp = _round_up(feat_chans, LANES)
        self.ncp = _round_up(num_classes, LANES)

        w_conv = jax.random.normal(k1, (3, 3, in_chans, feat_chans), jnp.float32) * 0.1
        b_conv = jax.random.normal(k2, (feat_chans,), jnp.float32) * 0.01
        w_cls = jax.random.normal(k3, (feat_chans, num_classes), jnp.float32) * 0.1
        b_cls = jax.random.normal(k4, (num_classes,), jnp.float32) * 0.01

        K = 9 * in_chans
        wm = w_conv.reshape(K, feat_chans)  # (kh, kw, Cin) flattening matches im2col
        self.w_conv = (jnp.zeros((K, self.cp), jnp.float32)
                       .at[:, :feat_chans].set(wm).astype(jnp.bfloat16))
        self.b_conv = jnp.zeros((1, self.cp), jnp.float32).at[0, :feat_chans].set(b_conv)
        self.w_cls = (jnp.zeros((self.cp, self.ncp), jnp.float32)
                      .at[:feat_chans, :num_classes].set(w_cls))
        self.b_cls = jnp.zeros((1, self.ncp), jnp.float32).at[0, :num_classes].set(b_cls)

    def forward(self, x_nchw, features=False):
        x = jnp.transpose(x_nchw, (0, 2, 3, 1)).astype(jnp.float32)   # NCHW -> NHWC
        N, H, W, Cin = x.shape
        HW = H * W
        patches = _im2col_3x3(x).astype(jnp.bfloat16)                 # (N, HW, 9*Cin)
        # TODO(synk): drop_rate dropout is identity in eval mode; SpatialAttention
        # is skipped because attention=None in the reference module.

        logits_p, feat_p = _fused_forward(
            patches, self.w_conv, self.b_conv, self.w_cls, self.b_cls,
            hw=HW, emit_features=features)
        logits = logits_p[:, :self.num_classes]
        if not features:
            return logits

        feat = feat_p[:, :HW, :self.feat_chans].reshape(N, H, W, self.feat_chans)
        return logits, jnp.transpose(feat, (0, 3, 1, 2))              # NCHW features


if __name__ == "__main__":
    key = jax.random.PRNGKey(0)
    x = jax.random.normal(key, (2, 4, 16, 16), jnp.float32)    # NCHW like PyTorch

    model = TimmModelPallas(in_chans=4, feat_chans=32, num_classes=10, seed=0)

    logits = model.forward(x)                                  # fused hot path
    jax.block_until_ready(logits)
    assert logits.shape == (2, 10)

    logits2, feat = model.forward(x, features=True)            # feature-map path
    jax.block_until_ready((logits2, feat))
    assert feat.shape == (2, 32, 16, 16)

    # both paths compute the same math (bf16 MXU inputs, f32 accumulation)
    assert jnp.allclose(logits, logits2, atol=1e-3, rtol=1e-3)

    # pure-JAX reference with identical bf16 inputs / f32 accumulation
    xh = jnp.transpose(x, (0, 2, 3, 1))
    p_ref = _im2col_3x3(xh).astype(jnp.bfloat16).astype(jnp.float32)
    y_ref = jnp.einsum('nsk,kc->nsc', p_ref,
                       model.w_conv.astype(jnp.float32)) + model.b_conv
    y_ref = y_ref * jax.nn.sigmoid(y_ref)
    pooled_ref = jnp.mean(y_ref, axis=1)
    logits_ref = (pooled_ref @ model.w_cls + model.b_cls)[:, :model.num_classes]
    assert jnp.allclose(logits, logits_ref, atol=5e-3, rtol=5e-3)
    feat_ref = jnp.transpose(
        y_ref[:, :, :model.feat_chans].reshape(2, 16, 16, model.feat_chans),
        (0, 3, 1, 2))
    assert jnp.allclose(feat, feat_ref, atol=5e-3, rtol=5e-3)

    print("KERNEL_OK")
</pallas_src>

<mosaic_0001>
module attributes {stable_mosaic.version = 11 : i64} {
  func.func @fused_conv_pool_cls_kernel(%arg0: i32, %arg1: memref<2x128x36xbf16, #tpu.memory_space<vmem>>, %arg2: memref<36x128xbf16, #tpu.memory_space<vmem>>, %arg3: memref<1x128xf32, #tpu.memory_space<vmem>>, %arg4: memref<128x128xf32, #tpu.memory_space<vmem>>, %arg5: memref<1x128xf32, #tpu.memory_space<vmem>>, %arg6: memref<2x128xf32, #tpu.memory_space<vmem>>, %arg7: memref<2x128xf32, #tpu.memory_space<vmem>>) attributes {dimension_semantics = [#tpu.dimension_semantics<arbitrary>], iteration_bounds = array<i64: 2>, scalar_prefetch = 0 : i64, scratch_operands = 1 : i64, tpu.core_type = #tpu.core_type<tc>, window_params = [{transform_indices = @transform_0, window_bounds = array<i64: 2, 128, 36>}, {pipeline_mode = #tpu.pipeline_mode<synchronous>, transform_indices = @transform_1, window_bounds = array<i64: 36, 128>}, {pipeline_mode = #tpu.pipeline_mode<synchronous>, transform_indices = @transform_2, window_bounds = array<i64: 1, 128>}, {pipeline_mode = #tpu.pipeline_mode<synchronous>, transform_indices = @transform_3, window_bounds = array<i64: 128, 128>}, {pipeline_mode = #tpu.pipeline_mode<synchronous>, transform_indices = @transform_4, window_bounds = array<i64: 1, 128>}, {pipeline_mode = #tpu.pipeline_mode<synchronous>, transform_indices = @transform_5, window_bounds = array<i64: 2, 128>}]} {
    %c0_i32 = arith.constant 0 : i32
    %0 = arith.cmpi eq, %arg0, %c0_i32 : i32
    %1 = arith.extui %0 : i1 to i32
    %c0_i32_0 = arith.constant 0 : i32
    %2 = arith.cmpi ne, %1, %c0_i32_0 : i32
    scf.if %2 {
      %cst_14 = arith.constant 0.000000e+00 : f32
      %23 = vector.broadcast %cst_14 : f32 to vector<2x128xf32>
      %c0_15 = arith.constant 0 : index
      %c0_16 = arith.constant 0 : index
      %24 = vector.load %arg7[%c0_15, %c0_16] : memref<2x128xf32, #tpu.memory_space<vmem>>, vector<2x128xf32>
      tpu.vector_store %arg7[%c0_15, %c0_16], %23 {strides = array<i32>} : memref<2x128xf32, #tpu.memory_space<vmem>>, vector<2x128xf32>,
    } else {
    }
    %c0 = arith.constant 0 : index
    %c0_1 = arith.constant 0 : index
    %c0_2 = arith.constant 0 : index
    %3 = vector.load %arg1[%c0, %c0_1, %c0_2] : memref<2x128x36xbf16, #tpu.memory_space<vmem>>, vector<2x128x36xbf16>
    %c0_3 = arith.constant 0 : index
    %c0_4 = arith.constant 0 : index
    %4 = vector.load %arg2[%c0_3, %c0_4] : memref<36x128xbf16, #tpu.memory_space<vmem>>, vector<36x128xbf16>
    %cst = arith.constant dense<0.000000e+00> : vector<2x128x128xf32>
    %5 = tpu.matmul %3, %4, %cst {dimension_numbers = #tpu.dot_dimension_numbers<[2], [0], [0, 1], [1], [0, 0, 0, 1, 1, 1], [], []>} : vector<2x128x36xbf16>, vector<36x128xbf16>, vector<2x128x128xf32> -> vector<2x128x128xf32>
    %c0_5 = arith.constant 0 : index
    %c0_6 = arith.constant 0 : index
    %6 = vector.load %arg3[%c0_5, %c0_6] : memref<1x128xf32, #tpu.memory_space<vmem>>, vector<1x128xf32>
    %7 = vector.shape_cast %6 : vector<1x128xf32> to vector<1x1x128xf32>
    %8 = vector.broadcast %7 : vector<1x1x128xf32> to vector<2x128x128xf32>
    %9 = arith.addf %5, %8 : vector<2x128x128xf32>
    %10 = arith.negf %9 : vector<2x128x128xf32>
    %11 = math.exp %10 : vector<2x128x128xf32>
    %cst_7 = arith.constant 1.000000e+00 : f32
    %12 = vector.broadcast %cst_7 : f32 to vector<2x128x128xf32>
    %13 = arith.addf %12, %11 : vector<2x128x128xf32>
    %14 = arith.divf %12, %13 : vector<2x128x128xf32>
    %15 = arith.mulf %9, %14 : vector<2x128x128xf32>
    %c0_8 = arith.constant 0 : index
    %c0_9 = arith.constant 0 : index
    %16 = vector.load %arg7[%c0_8, %c0_9] : memref<2x128xf32, #tpu.memory_space<vmem>>, vector<2x128xf32>
    %cst_10 = arith.constant dense<0.000000e+00> : vector<2x128xf32>
    %17 = vector.multi_reduction <add>, %15, %cst_10 [1] : vector<2x128x128xf32> to vector<2x128xf32>
    %18 = arith.addf %16, %17 : vector<2x128xf32>
    %c0_11 = arith.constant 0 : index
    %c0_12 = arith.constant 0 : index
    %19 = vector.load %arg7[%c0_11, %c0_12] : memref<2x128xf32, #tpu.memory_space<vmem>>, vector<2x128xf32>
    tpu.vector_store %arg7[%c0_11, %c0_12], %18 {strides = array<i32>} : memref<2x128xf32, #tpu.memory_space<vmem>>, vector<2x128xf32>,
    %c1_i32 = arith.constant 1 : i32
    %20 = arith.cmpi eq, %arg0, %c1_i32 : i32
    %21 = arith.extui %20 : i1 to i32
    %c0_i32_13 = arith.constant 0 : i32
    %22 = arith.cmpi ne, %21, %c0_i32_13 : i32
    scf.if %22 {
      %c0_14 = arith.constant 0 : index
      %c0_15 = arith.constant 0 : index
      %23 = vector.load %arg7[%c0_14, %c0_15] : memref<2x128xf32, #tpu.memory_space<vmem>>, vector<2x128xf32>
      %cst_16 = arith.constant 3.906250e-03 : f32
      %24 = vector.broadcast %cst_16 : f32 to vector<2x128xf32>
      %25 = arith.mulf %23, %24 : vector<2x128xf32>
      %c0_17 = arith.constant 0 : index
      %c0_18 = arith.constant 0 : index
      %26 = vector.load %arg4[%c0_17, %c0_18] : memref<128x128xf32, #tpu.memory_space<vmem>>, vector<128x128xf32>
      %cst_19 = arith.constant dense<0.000000e+00> : vector<2x128xf32>
      %27 = tpu.matmul %25, %26, %cst_19 {dimension_numbers = #tpu.dot_dimension_numbers<[1], [0], [0], [1], [0, 0, 1, 1], [], []>} : vector<2x128xf32>, vector<128x128xf32>, vector<2x128xf32> -> vector<2x128xf32>
      %c0_20 = arith.constant 0 : index
      %c0_21 = arith.constant 0 : index
      %28 = vector.load %arg5[%c0_20, %c0_21] : memref<1x128xf32, #tpu.memory_space<vmem>>, vector<1x128xf32>
      %29 = vector.broadcast %28 : vector<1x128xf32> to vector<2x128xf32>
      %30 = arith.addf %27, %29 : vector<2x128xf32>
      %c0_22 = arith.constant 0 : index
      %c0_23 = arith.constant 0 : index
      %31 = vector.load %arg6[%c0_22, %c0_23] : memref<2x128xf32, #tpu.memory_space<vmem>>, vector<2x128xf32>
      tpu.vector_store %arg6[%c0_22, %c0_23], %30 {strides = array<i32>} : memref<2x128xf32, #tpu.memory_space<vmem>>, vector<2x128xf32>,
    } else {
    }
    return
  }
  func.func @transform_0(%arg0: i32) -> (i32, i32, i32) {
    %c0_i32 = arith.constant 0 : i32
    %c0_i32_0 = arith.constant 0 : i32
    %c0_i32_1 = arith.constant 0 : i32
    return %c0_i32, %arg0, %c0_i32_0 : i32, i32, i32
  }
  func.func @transform_1(%arg0: i32) -> (i32, i32) {
    %c0_i32 = arith.constant 0 : i32
    %c0_i32_0 = arith.constant 0 : i32
    %c0_i32_1 = arith.constant 0 : i32
    return %c0_i32, %c0_i32_0 : i32, i32
  }
  func.func @transform_2(%arg0: i32) -> (i32, i32) {
    %c0_i32 = arith.constant 0 : i32
    %c0_i32_0 = arith.constant 0 : i32
    %c0_i32_1 = arith.constant 0 : i32
    return %c0_i32, %c0_i32_0 : i32, i32
  }
  func.func @transform_3(%arg0: i32) -> (i32, i32) {
    %c0_i32 = arith.constant 0 : i32
    %c0_i32_0 = arith.constant 0 : i32
    %c0_i32_1 = arith.constant 0 : i32
    return %c0_i32, %c0_i32_0 : i32, i32
  }
  func.func @transform_4(%arg0: i32) -> (i32, i32) {
    %c0_i32 = arith.constant 0 : i32
    %c0_i32_0 = arith.constant 0 : i32
    %c0_i32_1 = arith.constant 0 : i32
    return %c0_i32, %c0_i32_0 : i32, i32
  }
  func.func @transform_5(%arg0: i32) -> (i32, i32) {
    %c0_i32 = arith.constant 0 : i32
    %c0_i32_0 = arith.constant 0 : i32
    %c0_i32_1 = arith.constant 0 : i32
    return %c0_i32, %c0_i32_0 : i32, i32
  }
}

</mosaic_0001>

<llo_original>
// kernel: tpu_custom_call.1
$region0: #{tpu_custom_call.1}
  #allocation0 [shape = 'u32[]', space=smem, size = 0x4, offset = 0x4, fixed_abs, tag = 'smem constant byte address 0x4 - core index']
  #allocation1 [shape = 'u32[72,128]{1,0:T(1,128)}', space=vmem, size = 0x9000, scoped, tag = 'internal scratch']
  #allocation2 [shape = 'f32[2,128]{1,0:T(2,128)}', space=vmem, size = 0x400, scoped, tag = 'scratch operand']
  %s0 = inlined_call_operand.vmem [shape: bf16[2,256,36], index: 0, kind: input, shape index: {}]
  %s1 = inlined_call_operand.vmem [shape: bf16[36,128], index: 1, kind: input, shape index: {}]
  %s2 = inlined_call_operand.vmem [shape: f32[1,128], index: 2, kind: input, shape index: {}]
  %s3 = inlined_call_operand.vmem [shape: f32[128,128], index: 3, kind: input, shape index: {}]
  %s4 = inlined_call_operand.vmem [shape: f32[1,128], index: 4, kind: input, shape index: {}]
  %s5 = inlined_call_operand.hbm [shape: f32[2,128], index: 5, kind: output, shape index: {}]
  %s6 = sld [smem:[#allocation0]]
  $region102: #{tpu_custom_call.1} parent=0
    _
  %s8 = ssub.s32 1, %s6
  %s9 = scalar_select 0, %s8, %s6
  $region1: #{tpu_custom_call.1} parent=0
    #allocation3 [shape = 'u8[131072]{0}', space=vmem, size = 0x20000, scoped, tag = 'input window, operand 0']
    #allocation4 [shape = 'u8[1024]{0}', space=vmem, size = 0x400, scoped, tag = 'output window, operand 0, single buffered']
    #allocation5 [shape = 's32[2]{0}', space=sflag, size = 0x8, scoped, tag = 'scoped memory for tpu_custom_call.1']
    %10 = vsyncpa [#allocation5], 0
    loop: start=0, step=1, limit=4
    $region2: #{tpu_custom_call.1} parent=1 // loop_pre_header
      _
    $region3: #{tpu_custom_call.1} parent=1 // loop_header
      %s12 = sphi 0, %s16
      %p13 = scmp.ge.s32.totalorder %s12, 4
      %s22 = sphi 0, %s24
      %s25 = sphi 0, %s22
      %s26 = sphi 0, %s25
      %s42 = sphi 0, %s26
      %s46 = sphi 0, %s46
      %s48 = sphi 0, %s46
      %s49 = sphi 0, %s48
      %s63 = sphi 0, %s49
      %s67 = sphi 0, %s67
      %s69 = sphi 0, %s67
      %s70 = sphi 0, %s69
      %s84 = sphi 0, %s70
      %s88 = sphi 0, %s88
      %s90 = sphi 0, %s88
      %s91 = sphi 0, %s90
      %s105 = sphi 0, %s91
      %s109 = sphi 0, %s109
      %s111 = sphi 0, %s109
      %s112 = sphi 0, %s111
      %s126 = sphi 0, %s112
      %s130 = sphi 0, %s130
      %s132 = sphi 0, %s130
      %s133 = sphi 0, %s132
      %s147 = sphi 0, %s133
    $region4: #{tpu_custom_call.1} parent=1 // loop_header_branch
      %15 = sbr.rel (%p13) target = $region8
    $region5: #{tpu_custom_call.1} parent=1 // loop_body
      %s17 = ssub.s32 %s12, 1
      %s18 = ssub.s32 %s12, 2
      %s19 = sadd.s32 %s12, 1
      %s20 = ssub.s32 %s12, %s19
      %p21 = scmp.eq.s32.totalorder %s20, 0
      %s23 = sadd.s32 %s22, 1
      %s24 = scalar_select %p21, %s22, %s23
      %p27 = pneg %p21
      %p28 = scmp.eq.s32.totalorder %s12, 1
      %p29 = por %p27, %p28
      %p30 = scmp.ne.s32.totalorder %s22, %s25
      %p31 = scmp.eq.s32.totalorder %s12, 0
      %p32 = por %p30, %p31
      %p33 = scmp.ne.s32.totalorder %s22, %s25
      %p34 = scmp.eq.s32.totalorder %s17, 1
      %p35 = por %p33, %p34
      %p36 = scmp.ne.s32.totalorder %s25, %s26
      %p37 = scmp.eq.s32.totalorder %s17, 0
      %p38 = por %p36, %p37
      %p39 = scmp.ne.s32.totalorder %s25, %s26
      %p40 = scmp.eq.s32.totalorder %s18, 1
      %p41 = por %p39, %p40
      %p43 = scmp.ne.s32.totalorder %s26, %s42
      %p44 = scmp.eq.s32.totalorder %s18, 0
      %p45 = por %p43, %p44
      %s47 = sadd.s32 %s46, 1
      %p50 = scmp.eq.s32.totalorder %s12, 1
      %p51 = scmp.ne.s32.totalorder %s46, %s48
      %p52 = scmp.eq.s32.totalorder %s12, 0
      %p53 = por %p51, %p52
      %p54 = scmp.ne.s32.totalorder %s46, %s48
      %p55 = scmp.eq.s32.totalorder %s17, 1
      %p56 = por %p54, %p55
      %p57 = scmp.ne.s32.totalorder %s48, %s49
      %p58 = scmp.eq.s32.totalorder %s17, 0
      %p59 = por %p57, %p58
      %p60 = scmp.ne.s32.totalorder %s48, %s49
      %p61 = scmp.eq.s32.totalorder %s18, 1
      %p62 = por %p60, %p61
      %p64 = scmp.ne.s32.totalorder %s49, %s63
      %p65 = scmp.eq.s32.totalorder %s18, 0
      %p66 = por %p64, %p65
      %s68 = sadd.s32 %s67, 1
      %p71 = scmp.eq.s32.totalorder %s12, 1
      %p72 = scmp.ne.s32.totalorder %s67, %s69
      %p73 = scmp.eq.s32.totalorder %s12, 0
      %p74 = por %p72, %p73
      %p75 = scmp.ne.s32.totalorder %s67, %s69
      %p76 = scmp.eq.s32.totalorder %s17, 1
      %p77 = por %p75, %p76
      %p78 = scmp.ne.s32.totalorder %s69, %s70
      %p79 = scmp.eq.s32.totalorder %s17, 0
      %p80 = por %p78, %p79
      %p81 = scmp.ne.s32.totalorder %s69, %s70
      %p82 = scmp.eq.s32.totalorder %s18, 1
      %p83 = por %p81, %p82
      %p85 = scmp.ne.s32.totalorder %s70, %s84
      %p86 = scmp.eq.s32.totalorder %s18, 0
      %p87 = por %p85, %p86
      %s89 = sadd.s32 %s88, 1
      %p92 = scmp.eq.s32.totalorder %s12, 1
      %p93 = scmp.ne.s32.totalorder %s88, %s90
      %p94 = scmp.eq.s32.totalorder %s12, 0
      %p95 = por %p93, %p94
      %p96 = scmp.ne.s32.totalorder %s88, %s90
      %p97 = scmp.eq.s32.totalorder %s17, 1
      %p98 = por %p96, %p97
      %p99 = scmp.ne.s32.totalorder %s90, %s91
      %p100 = scmp.eq.s32.totalorder %s17, 0
      %p101 = por %p99, %p100
      %p102 = scmp.ne.s32.totalorder %s90, %s91
      %p103 = scmp.eq.s32.totalorder %s18, 1
      %p104 = por %p102, %p103
      %p106 = scmp.ne.s32.totalorder %s91, %s105
      %p107 = scmp.eq.s32.totalorder %s18, 0
      %p108 = por %p106, %p107
      %s110 = sadd.s32 %s109, 1
      %p113 = scmp.eq.s32.totalorder %s12, 1
      %p114 = scmp.ne.s32.totalorder %s109, %s111
      %p115 = scmp.eq.s32.totalorder %s12, 0
      %p116 = por %p114, %p115
      %p117 = scmp.ne.s32.totalorder %s109, %s111
      %p118 = scmp.eq.s32.totalorder %s17, 1
      %p119 = por %p117, %p118
      %p120 = scmp.ne.s32.totalorder %s111, %s112
      %p121 = scmp.eq.s32.totalorder %s17, 0
      %p122 = por %p120, %p121
      %p123 = scmp.ne.s32.totalorder %s111, %s112
      %p124 = scmp.eq.s32.totalorder %s18, 1
      %p125 = por %p123, %p124
      %p127 = scmp.ne.s32.totalorder %s112, %s126
      %p128 = scmp.eq.s32.totalorder %s18, 0
      %p129 = por %p127, %p128
      %s131 = sadd.s32 %s130, 1
      %p134 = scmp.eq.s32.totalorder %s12, 1
      %p135 = scmp.ne.s32.totalorder %s130, %s132
      %p136 = scmp.eq.s32.totalorder %s12, 0
      %p137 = por %p135, %p136
      %p138 = scmp.ne.s32.totalorder %s130, %s132
      %p139 = scmp.eq.s32.totalorder %s17, 1
      %p140 = por %p138, %p139
      %p141 = scmp.ne.s32.totalorder %s132, %s133
      %p142 = scmp.eq.s32.totalorder %s17, 0
      %p143 = por %p141, %p142
      %p144 = scmp.ne.s32.totalorder %s132, %s133
      %p145 = scmp.eq.s32.totalorder %s18, 1
      %p146 = por %p144, %p145
      %p148 = scmp.ne.s32.totalorder %s133, %s147
      %p149 = scmp.eq.s32.totalorder %s18, 0
      %p150 = por %p148, %p149
      %p151 = scmp.le.s32.totalorder 1, %s12
      %p152 = scmp.lt.s32.totalorder %s12, 3
      %p153 = pnand %p151, %p152
      %p154 = pneg %p153
      // Predicated region
      $region9: #{tpu_custom_call.1} parent=5 // pred_check
        _
      $region10: #{tpu_custom_call.1} parent=5 // pred_check_branch
        %156 = sbr.rel (%p153) target = $region12
      $region11: #{tpu_custom_call.1} parent=5 // pred_region
        %s157 = ssub.s32 %s12, 1
        // Predicated region
        $region13: #{tpu_custom_call.1} parent=11 // pred_check
          %p158 = pneg %p59
        $region14: #{tpu_custom_call.1} parent=11 // pred_check_branch
          %160 = sbr.rel (%p158) target = $region16
        $region15: #{tpu_custom_call.1} parent=11 // pred_region
          _
        $region16: #{tpu_custom_call.1} parent=11 // pred_fallthru
          _
        // Predicated region
        $region17: #{tpu_custom_call.1} parent=11 // pred_check
          %p161 = pneg %p80
        $region18: #{tpu_custom_call.1} parent=11 // pred_check_branch
          %163 = sbr.rel (%p161) target = $region20
        $region19: #{tpu_custom_call.1} parent=11 // pred_region
          _
        $region20: #{tpu_custom_call.1} parent=11 // pred_fallthru
          _
        // Predicated region
        $region21: #{tpu_custom_call.1} parent=11 // pred_check
          %p164 = pneg %p101
        $region22: #{tpu_custom_call.1} parent=11 // pred_check_branch
          %166 = sbr.rel (%p164) target = $region24
        $region23: #{tpu_custom_call.1} parent=11 // pred_region
          _
        $region24: #{tpu_custom_call.1} parent=11 // pred_fallthru
          _
        // Predicated region
        $region25: #{tpu_custom_call.1} parent=11 // pred_check
          %p167 = pneg %p122
        $region26: #{tpu_custom_call.1} parent=11 // pred_check_branch
          %169 = sbr.rel (%p167) target = $region28
        $region27: #{tpu_custom_call.1} parent=11 // pred_region
          _
        $region28: #{tpu_custom_call.1} parent=11 // pred_fallthru
          _
      $region12: #{tpu_custom_call.1} parent=5 // pred_fallthru
        _
      %p170 = scmp.lt.s32.totalorder %s12, 2
      // Predicated region
      $region29: #{tpu_custom_call.1} parent=5 // pred_check
        %p171 = pneg %p170
      $region30: #{tpu_custom_call.1} parent=5 // pred_check_branch
        %173 = sbr.rel (%p171) target = $region32
      $region31: #{tpu_custom_call.1} parent=5 // pred_region
        // Predicated region
        $region33: #{tpu_custom_call.1} parent=31 // pred_check
          %p174 = pneg %p32
        $region34: #{tpu_custom_call.1} parent=31 // pred_check_branch
          %176 = sbr.rel (%p174) target = $region36
        $region35: #{tpu_custom_call.1} parent=31 // pred_region
          %s177 = sand.u32 %s22, 1
          %s178 = sand.u32 %s22, 1
          %s179 = smul.addr %s178, 128
          %s180 = scalar_lea.vmem [#allocation3], %s179
          %s181 = smul.u32 16, %s12
          %s182 = smul.addr %s181, 4
          %s183 = scalar_lea.vmem %s0, %s182
          // Predicated region
          $region37: #{tpu_custom_call.1} parent=35 // pred_check
            _
          $region38: #{tpu_custom_call.1} parent=35 // pred_check_branch
            %185 = sbr.rel (0) target = $region40
          $region39: #{tpu_custom_call.1} parent=35 // pred_region
            // Predicated region
            $region41: #{tpu_custom_call.1} parent=39 // pred_check
              _
            $region42: #{tpu_custom_call.1} parent=39 // pred_check_branch
              %187 = sbr.rel target = $region44
            $region43: #{tpu_custom_call.1} parent=39 // pred_region
              // Predicated region
              $region56: #{tpu_custom_call.1} parent=43 // pred_check
                _
              $region57: #{tpu_custom_call.1} parent=43 // pred_check_branch
                %265 = sbr.rel (0) target = $region59
              $region58: #{tpu_custom_call.1} parent=43 // pred_region
                loop: start=0, step=1, limit=1
                $region60: #{tpu_custom_call.1} parent=58 // loop_pre_header
                  _
                $region61: #{tpu_custom_call.1} parent=58 // loop_header
                  %s267 = sphi 0, %s271
                  %p268 = scmp.ge.s32.totalorder %s267, 1
                  %s272 = sphi %s183, %s183
                  %s273 = sphi %s180, %s180
                $region62: #{tpu_custom_call.1} parent=58 // loop_header_branch
                  %270 = sbr.rel (%p268) target = $region66
                $region63: #{tpu_custom_call.1} parent=58 // loop_body
                  _
                $region64: #{tpu_custom_call.1} parent=58 // loop_footer
                  %s271 = sadd.s32 1, %s267
                $region65: #{tpu_custom_call.1} parent=58 // loop_footer_branch
                  %266 = sbr.rel target = $region61
                $region66: #{tpu_custom_call.1} parent=58 // loop_exit
                  _
                %s275 = ssub.s32 16, 1
                loop: start=0, step=1, limit=1
                $region67: #{tpu_custom_call.1} parent=58 // loop_pre_header
                  _
                $region68: #{tpu_custom_call.1} parent=58 // loop_header
                  %s277 = sphi 0, %s281
                  %p278 = scmp.ge.s32.totalorder %s277, 1
                  %s282 = sphi %s183, %s183
                  %s283 = sphi %s180, %s180
                $region69: #{tpu_custom_call.1} parent=58 // loop_header_branch
                  %280 = sbr.rel (%p278) target = $region73
                $region70: #{tpu_custom_call.1} parent=58 // loop_body
                  %v284 = vld [vmem:[%s282] sm:%s275]
                  %285 = vst [vmem:[%s283] sm:%s275] %v284
                  %v286 = vld [vmem:[%s282 + $0x4] sm:%s275]
                  %287 = vst [vmem:[%s283 + $0x4] sm:%s275] %v286
                  %v288 = vld [vmem:[%s282 + $0x8] sm:%s275]
                  %289 = vst [vmem:[%s283 + $0x8] sm:%s275] %v288
                  %v290 = vld [vmem:[%s282 + $0xc] sm:%s275]
                  %291 = vst [vmem:[%s283 + $0xc] sm:%s275] %v290
                  %v292 = vld [vmem:[%s282 + $0x10] sm:%s275]
                  %293 = vst [vmem:[%s283 + $0x10] sm:%s275] %v292
                  %v294 = vld [vmem:[%s282 + $0x14] sm:%s275]
                  %295 = vst [vmem:[%s283 + $0x14] sm:%s275] %v294
                  %v296 = vld [vmem:[%s282 + $0x18] sm:%s275]
                  %297 = vst [vmem:[%s283 + $0x18] sm:%s275] %v296
                  %v298 = vld [vmem:[%s282 + $0x1c] sm:%s275]
                  %299 = vst [vmem:[%s283 + $0x1c] sm:%s275] %v298
                  %v300 = vld [vmem:[%s282 + $0x20] sm:%s275]
                  %301 = vst [vmem:[%s283 + $0x20] sm:%s275] %v300
                  %v302 = vld [vmem:[%s282 + $0x24] sm:%s275]
                  %303 = vst [vmem:[%s283 + $0x24] sm:%s275] %v302
                  %v304 = vld [vmem:[%s282 + $0x28] sm:%s275]
                  %305 = vst [vmem:[%s283 + $0x28] sm:%s275] %v304
                  %v306 = vld [vmem:[%s282 + $0x2c] sm:%s275]
                  %307 = vst [vmem:[%s283 + $0x2c] sm:%s275] %v306
                  %v308 = vld [vmem:[%s282 + $0x30] sm:%s275]
                  %309 = vst [vmem:[%s283 + $0x30] sm:%s275] %v308
                  %v310 = vld [vmem:[%s282 + $0x34] sm:%s275]
                  %311 = vst [vmem:[%s283 + $0x34] sm:%s275] %v310
                  %v312 = vld [vmem:[%s282 + $0x38] sm:%s275]
                  %313 = vst [vmem:[%s283 + $0x38] sm:%s275] %v312
                  %v314 = vld [vmem:[%s282 + $0x3c] sm:%s275]
                  %315 = vst [vmem:[%s283 + $0x3c] sm:%s275] %v314
                  %v316 = vld [vmem:[%s282 + $0x80] sm:%s275]
                  %317 = vst [vmem:[%s283 + $0x40] sm:%s275] %v316
                  %v318 = vld [vmem:[%s282 + $0x84] sm:%s275]
                  %319 = vst [vmem:[%s283 + $0x44] sm:%s275] %v318
                  %v320 = vld [vmem:[%s282 + $0x88] sm:%s275]
                  %321 = vst [vmem:[%s283 + $0x48] sm:%s275] %v320
                  %v322 = vld [vmem:[%s282 + $0x8c] sm:%s275]
                  %323 = vst [vmem:[%s283 + $0x4c] sm:%s275] %v322
                  %v324 = vld [vmem:[%s282 + $0x90] sm:%s275]
                  %325 = vst [vmem:[%s283 + $0x50] sm:%s275] %v324
                  %v326 = vld [vmem:[%s282 + $0x94] sm:%s275]
                  %327 = vst [vmem:[%s283 + $0x54] sm:%s275] %v326
                  %v328 = vld [vmem:[%s282 + $0x98] sm:%s275]
                  %329 = vst [vmem:[%s283 + $0x58] sm:%s275] %v328
                  %v330 = vld [vmem:[%s282 + $0x9c] sm:%s275]
                  %331 = vst [vmem:[%s283 + $0x5c] sm:%s275] %v330
                  %v332 = vld [vmem:[%s282 + $0xa0] sm:%s275]
                  %333 = vst [vmem:[%s283 + $0x60] sm:%s275] %v332
                  %v334 = vld [vmem:[%s282 + $0xa4] sm:%s275]
                  %335 = vst [vmem:[%s283 + $0x64] sm:%s275] %v334
                  %v336 = vld [vmem:[%s282 + $0xa8] sm:%s275]
                  %337 = vst [vmem:[%s283 + $0x68] sm:%s275] %v336
                  %v338 = vld [vmem:[%s282 + $0xac] sm:%s275]
                  %339 = vst [vmem:[%s283 + $0x6c] sm:%s275] %v338
                  %v340 = vld [vmem:[%s282 + $0xb0] sm:%s275]
                  %341 = vst [vmem:[%s283 + $0x70] sm:%s275] %v340
                  %v342 = vld [vmem:[%s282 + $0xb4] sm:%s275]
                  %343 = vst [vmem:[%s283 + $0x74] sm:%s275] %v342
                  %v344 = vld [vmem:[%s282 + $0xb8] sm:%s275]
                  %345 = vst [vmem:[%s283 + $0x78] sm:%s275] %v344
                  %v346 = vld [vmem:[%s282 + $0xbc] sm:%s275]
                  %347 = vst [vmem:[%s283 + $0x7c] sm:%s275] %v346
                $region71: #{tpu_custom_call.1} parent=58 // loop_footer
                  %s281 = sadd.s32 1, %s277
                $region72: #{tpu_custom_call.1} parent=58 // loop_footer_branch
                  %276 = sbr.rel target = $region68
                $region73: #{tpu_custom_call.1} parent=58 // loop_exit
                  _
              $region59: #{tpu_custom_call.1} parent=43 // pred_fallthru
                _
            $region44: #{tpu_custom_call.1} parent=39 // pred_fallthru
              _
            // Predicated region
            $region45: #{tpu_custom_call.1} parent=39 // pred_check
              _
            $region46: #{tpu_custom_call.1} parent=39 // pred_check_branch
              %189 = sbr.rel (0) target = $region48
            $region47: #{tpu_custom_call.1} parent=39 // pred_region
              %s191 = ssub.s32 16, 1
              loop: start=0, step=1, limit=1
              $region49: #{tpu_custom_call.1} parent=47 // loop_pre_header
                _
              $region50: #{tpu_custom_call.1} parent=47 // loop_header
                %s193 = sphi 0, %s197
                %p194 = scmp.ge.s32.totalorder %s193, 1
                %s198 = sphi %s183, %s183
                %s199 = sphi %s180, %s180
              $region51: #{tpu_custom_call.1} parent=47 // loop_header_branch
                %196 = sbr.rel (%p194) target = $region55
              $region52: #{tpu_custom_call.1} parent=47 // loop_body
                %v200 = vld [vmem:[%s198] sm:%s191]
                %201 = vst [vmem:[%s199] sm:%s191] %v200
                %v202 = vld [vmem:[%s198 + $0x4] sm:%s191]
                %203 = vst [vmem:[%s199 + $0x4] sm:%s191] %v202
                %v204 = vld [vmem:[%s198 + $0x8] sm:%s191]
                %205 = vst [vmem:[%s199 + $0x8] sm:%s191] %v204
                %v206 = vld [vmem:[%s198 + $0xc] sm:%s191]
                %207 = vst [vmem:[%s199 + $0xc] sm:%s191] %v206
                %v208 = vld [vmem:[%s198 + $0x10] sm:%s191]
                %209 = vst [vmem:[%s199 + $0x10] sm:%s191] %v208
                %v210 = vld [vmem:[%s198 + $0x14] sm:%s191]
                %211 = vst [vmem:[%s199 + $0x14] sm:%s191] %v210
                %v212 = vld [vmem:[%s198 + $0x18] sm:%s191]
                %213 = vst [vmem:[%s199 + $0x18] sm:%s191] %v212
                %v214 = vld [vmem:[%s198 + $0x1c] sm:%s191]
                %215 = vst [vmem:[%s199 + $0x1c] sm:%s191] %v214
                %v216 = vld [vmem:[%s198 + $0x20] sm:%s191]
                %217 = vst [vmem:[%s199 + $0x20] sm:%s191] %v216
                %v218 = vld [vmem:[%s198 + $0x24] sm:%s191]
                %219 = vst [vmem:[%s199 + $0x24] sm:%s191] %v218
                %v220 = vld [vmem:[%s198 + $0x28] sm:%s191]
                %221 = vst [vmem:[%s199 + $0x28] sm:%s191] %v220
                %v222 = vld [vmem:[%s198 + $0x2c] sm:%s191]
                %223 = vst [vmem:[%s199 + $0x2c] sm:%s191] %v222
                %v224 = vld [vmem:[%s198 + $0x30] sm:%s191]
                %225 = vst [vmem:[%s199 + $0x30] sm:%s191] %v224
                %v226 = vld [vmem:[%s198 + $0x34] sm:%s191]
                %227 = vst [vmem:[%s199 + $0x34] sm:%s191] %v226
                %v228 = vld [vmem:[%s198 + $0x38] sm:%s191]
                %229 = vst [vmem:[%s199 + $0x38] sm:%s191] %v228
                %v230 = vld [vmem:[%s198 + $0x3c] sm:%s191]
                %231 = vst [vmem:[%s199 + $0x3c] sm:%s191] %v230
                %v232 = vld [vmem:[%s198 + $0x80] sm:%s191]
                %233 = vst [vmem:[%s199 + $0x40] sm:%s191] %v232
                %v234 = vld [vmem:[%s198 + $0x84] sm:%s191]
                %235 = vst [vmem:[%s199 + $0x44] sm:%s191] %v234
                %v236 = vld [vmem:[%s198 + $0x88] sm:%s191]
                %237 = vst [vmem:[%s199 + $0x48] sm:%s191] %v236
                %v238 = vld [vmem:[%s198 + $0x8c] sm:%s191]
                %239 = vst [vmem:[%s199 + $0x4c] sm:%s191] %v238
                %v240 = vld [vmem:[%s198 + $0x90] sm:%s191]
                %241 = vst [vmem:[%s199 + $0x50] sm:%s191] %v240
                %v242 = vld [vmem:[%s198 + $0x94] sm:%s191]
                %243 = vst [vmem:[%s199 + $0x54] sm:%s191] %v242
                %v244 = vld [vmem:[%s198 + $0x98] sm:%s191]
                %245 = vst [vmem:[%s199 + $0x58] sm:%s191] %v244
                %v246 = vld [vmem:[%s198 + $0x9c] sm:%s191]
                %247 = vst [vmem:[%s199 + $0x5c] sm:%s191] %v246
                %v248 = vld [vmem:[%s198 + $0xa0] sm:%s191]
                %249 = vst [vmem:[%s199 + $0x60] sm:%s191] %v248
                %v250 = vld [vmem:[%s198 + $0xa4] sm:%s191]
                %251 = vst [vmem:[%s199 + $0x64] sm:%s191] %v250
                %v252 = vld [vmem:[%s198 + $0xa8] sm:%s191]
                %253 = vst [vmem:[%s199 + $0x68] sm:%s191] %v252
                %v254 = vld [vmem:[%s198 + $0xac] sm:%s191]
                %255 = vst [vmem:[%s199 + $0x6c] sm:%s191] %v254
                %v256 = vld [vmem:[%s198 + $0xb0] sm:%s191]
                %257 = vst [vmem:[%s199 + $0x70] sm:%s191] %v256
                %v258 = vld [vmem:[%s198 + $0xb4] sm:%s191]
                %259 = vst [vmem:[%s199 + $0x74] sm:%s191] %v258
                %v260 = vld [vmem:[%s198 + $0xb8] sm:%s191]
                %261 = vst [vmem:[%s199 + $0x78] sm:%s191] %v260
                %v262 = vld [vmem:[%s198 + $0xbc] sm:%s191]
                %263 = vst [vmem:[%s199 + $0x7c] sm:%s191] %v262
              $region53: #{tpu_custom_call.1} parent=47 // loop_footer
                %s197 = sadd.s32 1, %s193
              $region54: #{tpu_custom_call.1} parent=47 // loop_footer_branch
                %192 = sbr.rel target = $region50
              $region55: #{tpu_custom_call.1} parent=47 // loop_exit
                _
            $region48: #{tpu_custom_call.1} parent=39 // pred_fallthru
              _
          $region40: #{tpu_custom_call.1} parent=35 // pred_fallthru
            _
          %348 = vnop
        $region36: #{tpu_custom_call.1} parent=31 // pred_fallthru
          _
      $region32: #{tpu_custom_call.1} parent=5 // pred_fallthru
        _
      %p349 = scmp.le.s32.totalorder 1, %s12
      %p350 = scmp.lt.s32.totalorder %s12, 3
      %p351 = pnand %p349, %p350
      %p352 = pneg %p351
      // Predicated region
      $region74: #{tpu_custom_call.1} parent=5 // pred_check
        _
      $region75: #{tpu_custom_call.1} parent=5 // pred_check_branch
        %354 = sbr.rel (%p351) target = $region77
      $region76: #{tpu_custom_call.1} parent=5 // pred_region
        %s355 = ssub.s32 %s12, 1
        %s356 = sand.u32 %s25, 1
        %s357 = sand.u32 %s25, 1
        %s358 = smul.addr %s357, 128
        %s359 = scalar_lea.vmem [#allocation3], %s358
        // Predicated region
        $region78: #{tpu_custom_call.1} parent=76 // pred_check
          %p360 = pneg %p38
        $region79: #{tpu_custom_call.1} parent=76 // pred_check_branch
          %362 = sbr.rel (%p360) target = $region81
        $region80: #{tpu_custom_call.1} parent=76 // pred_region
          _
        $region81: #{tpu_custom_call.1} parent=76 // pred_fallthru
          _
        %s363 = sand.u32 %s25, 1
        %s364 = sand.u32 %s25, 1
        %s365 = smul.addr %s364, 128
        %s366 = scalar_lea.vmem [#allocation3], %s365
        %p367 = pneg %p38
        %p368 = pneg %p35
        %p369 = pneg %p59
        %p370 = pneg %p56
        %p371 = pneg %p80
        %p372 = pneg %p77
        %p373 = pneg %p101
        %p374 = pneg %p98
        %p375 = pneg %p122
        %p376 = pneg %p119
        %p377 = pneg %p143
        %p378 = pneg %p140
        %s379 = smul.u32 16, %s17
        %p381 = scmp.eq.s32.totalorder %s17, 0
        // Predicated region
        $region82: #{tpu_custom_call.1} parent=76 // pred_check
          %p382 = pneg %p381
        $region83: #{tpu_custom_call.1} parent=76 // pred_check_branch
          %384 = sbr.rel (%p382) target = $region85
        $region84: #{tpu_custom_call.1} parent=76 // pred_region
          %385 = vst [vmem:[#allocation2] sm:$0x3] 0.0
        $region85: #{tpu_custom_call.1} parent=76 // pred_fallthru
          _
        %v386 = vld [vmem:[%s359] sm:$0xf]
        %v387 = vld [vmem:[%s359 + $0x4] sm:$0xf]
        %v388 = vld [vmem:[%s359 + $0x8] sm:$0xf]
        %v389 = vld [vmem:[%s359 + $0xc] sm:$0xf]
        %v390 = vld [vmem:[%s359 + $0x10] sm:$0xf]
        %v391 = vld [vmem:[%s359 + $0x14] sm:$0xf]
        %v392 = vld [vmem:[%s359 + $0x18] sm:$0xf]
        %v393 = vld [vmem:[%s359 + $0x1c] sm:$0xf]
        %v394 = vld [vmem:[%s359 + $0x20] sm:$0xf]
        %v395 = vld [vmem:[%s359 + $0x24] sm:$0xf]
        %v396 = vld [vmem:[%s359 + $0x28] sm:$0xf]
        %v397 = vld [vmem:[%s359 + $0x2c] sm:$0xf]
        %v398 = vld [vmem:[%s359 + $0x30] sm:$0xf]
        %v399 = vld [vmem:[%s359 + $0x34] sm:$0xf]
        %v400 = vld [vmem:[%s359 + $0x38] sm:$0xf]
        %v401 = vld [vmem:[%s359 + $0x3c] sm:$0xf]
        %v402 = vld [vmem:[%s359 + $0x40] sm:$0xf]
        %v403 = vld [vmem:[%s359 + $0x44] sm:$0xf]
        %v404 = vld [vmem:[%s359 + $0x48] sm:$0xf]
        %v405 = vld [vmem:[%s359 + $0x4c] sm:$0xf]
        %v406 = vld [vmem:[%s359 + $0x50] sm:$0xf]
        %v407 = vld [vmem:[%s359 + $0x54] sm:$0xf]
        %v408 = vld [vmem:[%s359 + $0x58] sm:$0xf]
        %v409 = vld [vmem:[%s359 + $0x5c] sm:$0xf]
        %v410 = vld [vmem:[%s359 + $0x60] sm:$0xf]
        %v411 = vld [vmem:[%s359 + $0x64] sm:$0xf]
        %v412 = vld [vmem:[%s359 + $0x68] sm:$0xf]
        %v413 = vld [vmem:[%s359 + $0x6c] sm:$0xf]
        %v414 = vld [vmem:[%s359 + $0x70] sm:$0xf]
        %v415 = vld [vmem:[%s359 + $0x74] sm:$0xf]
        %v416 = vld [vmem:[%s359 + $0x78] sm:$0xf]
        %v417 = vld [vmem:[%s359 + $0x7c] sm:$0xf]
        %v418 = vld [vmem:[%s1] sm:$0xf]
        %v419 = vld [vmem:[%s1 + $0x4] sm:$0xf]
        %v420 = vld [vmem:[%s1 + $0x8] sm:$0xf]
        %v421 = vld [vmem:[%s1 + $0xc] sm:$0xf]
        %v422 = vld [vmem:[%s1 + $0x10] sm:$0x3]
        %v423 = vld [vmem:[%s2] sm:$0x1]
        %v425 = vperm.slane %v423, 0
        %v459 = vunpack.c.l.b16 %v386
        %v460 = vunpack.c.l.b16 %v387
        %v461 = vunpack.c.l.b16 %v388
        %v462 = vunpack.c.l.b16 %v389
        %v463 = vunpack.c.l.b16 %v390
        %v464 = vunpack.c.l.b16 %v391
        %v465 = vunpack.c.l.b16 %v392
        %v466 = vunpack.c.l.b16 %v393
        %v467 = vunpack.c.l.b16 %v394
        %v468 = vunpack.c.l.b16 %v395
        %v469 = vunpack.c.l.b16 %v396
        %v470 = vunpack.c.l.b16 %v397
        %v471 = vunpack.c.l.b16 %v398
        %v472 = vunpack.c.l.b16 %v399
        %v473 = vunpack.c.l.b16 %v400
        %v474 = vunpack.c.l.b16 %v401
        %v475 = vunpack.c.l.b16 %v402
        %v476 = vunpack.c.l.b16 %v403
        %v477 = vunpack.c.l.b16 %v404
        %v478 = vunpack.c.l.b16 %v405
        %v479 = vunpack.c.l.b16 %v406
        %v480 = vunpack.c.l.b16 %v407
        %v481 = vunpack.c.l.b16 %v408
        %v482 = vunpack.c.l.b16 %v409
        %v483 = vunpack.c.l.b16 %v410
        %v484 = vunpack.c.l.b16 %v411
        %v485 = vunpack.c.l.b16 %v412
        %v486 = vunpack.c.l.b16 %v413
        %v487 = vunpack.c.l.b16 %v414
        %v488 = vunpack.c.l.b16 %v415
        %v489 = vunpack.c.l.b16 %v416
        %v490 = vunpack.c.l.b16 %v417
        %v491 = vpack.c.b16 %v460, %v459
        %v492 = vpack.c.b16 %v462, %v461
        %v493 = vpack.c.b16 %v464, %v463
        %v494 = vpack.c.b16 %v466, %v465
        %v495 = vpack.c.b16 %v468, %v467
        %v496 = vpack.c.b16 %v470, %v469
        %v497 = vpack.c.b16 %v472, %v471
        %v498 = vpack.c.b16 %v474, %v473
        %v499 = vpack.c.b16 %v476, %v475
        %v500 = vpack.c.b16 %v478, %v477
        %v501 = vpack.c.b16 %v480, %v479
        %v502 = vpack.c.b16 %v482, %v481
        %v503 = vpack.c.b16 %v484, %v483
        %v504 = vpack.c.b16 %v486, %v485
        %v505 = vpack.c.b16 %v488, %v487
        %v506 = vpack.c.b16 %v490, %v489
        %v512 = vunpack.c.l.b16 %v418
        %v513 = vunpack.c.l.b16 %v419
        %v514 = vunpack.c.l.b16 %v420
        %v515 = vunpack.c.l.b16 %v421
        %v516 = vunpack.c.l.b16 %v422
        %v517 = vpack.c.b16 %v513, %v512
        %v518 = vpack.c.b16 %v515, %v514
        %v519 = vpack.c.b16 %v516, %v516
        %vm522 = vcmask 293888
        %v524 = vsel %vm522, %v491, 0
        %v527 = vsel %vm522, %v492, 0
        %v530 = vsel %vm522, %v493, 0
        %v533 = vsel %vm522, %v494, 0
        %v536 = vsel %vm522, %v495, 0
        %v539 = vsel %vm522, %v496, 0
        %v542 = vsel %vm522, %v497, 0
        %v545 = vsel %vm522, %v498, 0
        %v548 = vsel %vm522, %v499, 0
        %v551 = vsel %vm522, %v500, 0
        %v554 = vsel %vm522, %v501, 0
        %v557 = vsel %vm522, %v502, 0
        %v560 = vsel %vm522, %v503, 0
        %v563 = vsel %vm522, %v504, 0
        %v566 = vsel %vm522, %v505, 0
        %v569 = vsel %vm522, %v506, 0
        %vm571 = vcmask 1041408
        %v573 = vsel %vm571, %v519, 0
        %575 = vmatpush.bf16.msra.mxu0 0
        %576 = vmatpush.bf16.msra.mxu0 0
        %577 = vmatpush.bf16.msra.mxu0 0
        %578 = vmatpush.bf16.msra.mxu0 0
        %579 = vmatpush.bf16.msra.mxu0 0
        %580 = vmatpush.bf16.msra.mxu0 %v573
        %581 = vmatpush.bf16.msra.mxu0 %v518
        %582 = vmatpush.bf16.msra.mxu0 %v517
        %583 = vmatmul.bf16.gmra.mxu0 %v524
        %v584 = vpop.f32.mrf.mxu0
        %v585 = vadd.f32 %v425, %v584
        %v586 = vpop.f32.mrf.mxu0
        %v587 = vadd.f32 %v425, %v586
        %588 = vmatmul.bf16.gmra.mxu0 %v527
        %v589 = vpop.f32.mrf.mxu0
        %v590 = vadd.f32 %v425, %v589
        %v591 = vpop.f32.mrf.mxu0
        %v592 = vadd.f32 %v425, %v591
        %593 = vmatmul.bf16.gmra.mxu0 %v530
        %v594 = vpop.f32.mrf.mxu0
        %v595 = vadd.f32 %v425, %v594
        %v596 = vpop.f32.mrf.mxu0
        %v597 = vadd.f32 %v425, %v596
        %598 = vmatmul.bf16.gmra.mxu0 %v533
        %v599 = vpop.f32.mrf.mxu0
        %v600 = vadd.f32 %v425, %v599
        %v601 = vpop.f32.mrf.mxu0
        %v602 = vadd.f32 %v425, %v601
        %603 = vmatmul.bf16.gmra.mxu0 %v536
        %v604 = vpop.f32.mrf.mxu0
        %v605 = vadd.f32 %v425, %v604
        %v606 = vpop.f32.mrf.mxu0
        %v607 = vadd.f32 %v425, %v606
        %608 = vmatmul.bf16.gmra.mxu0 %v539
        %v609 = vpop.f32.mrf.mxu0
        %v610 = vadd.f32 %v425, %v609
        %v611 = vpop.f32.mrf.mxu0
        %v612 = vadd.f32 %v425, %v611
        %613 = vmatmul.bf16.gmra.mxu0 %v542
        %v614 = vpop.f32.mrf.mxu0
        %v615 = vadd.f32 %v425, %v614
        %v616 = vpop.f32.mrf.mxu0
        %v617 = vadd.f32 %v425, %v616
        %618 = vmatmul.bf16.gmra.mxu0 %v545
        %v619 = vpop.f32.mrf.mxu0
        %v620 = vadd.f32 %v425, %v619
        %v621 = vpop.f32.mrf.mxu0
        %v622 = vadd.f32 %v425, %v621
        %623 = vmatmul.bf16.gmra.mxu0 %v548
        %v624 = vpop.f32.mrf.mxu0
        %v625 = vadd.f32 %v425, %v624
        %v626 = vpop.f32.mrf.mxu0
        %v627 = vadd.f32 %v425, %v626
        %628 = vmatmul.bf16.gmra.mxu0 %v551
        %v629 = vpop.f32.mrf.mxu0
        %v630 = vadd.f32 %v425, %v629
        %v631 = vpop.f32.mrf.mxu0
        %v632 = vadd.f32 %v425, %v631
        %633 = vmatmul.bf16.gmra.mxu0 %v554
        %v634 = vpop.f32.mrf.mxu0
        %v635 = vadd.f32 %v425, %v634
        %v636 = vpop.f32.mrf.mxu0
        %v637 = vadd.f32 %v425, %v636
        %638 = vmatmul.bf16.gmra.mxu0 %v557
        %v639 = vpop.f32.mrf.mxu0
        %v640 = vadd.f32 %v425, %v639
        %v641 = vpop.f32.mrf.mxu0
        %v642 = vadd.f32 %v425, %v641
        %643 = vmatmul.bf16.gmra.mxu0 %v560
        %v644 = vpop.f32.mrf.mxu0
        %v645 = vadd.f32 %v425, %v644
        %v646 = vpop.f32.mrf.mxu0
        %v647 = vadd.f32 %v425, %v646
        %648 = vmatmul.bf16.gmra.mxu0 %v563
        %v649 = vpop.f32.mrf.mxu0
        %v650 = vadd.f32 %v425, %v649
        %v651 = vpop.f32.mrf.mxu0
        %v652 = vadd.f32 %v425, %v651
        %653 = vmatmul.bf16.gmra.mxu0 %v566
        %v654 = vpop.f32.mrf.mxu0
        %v655 = vadd.f32 %v425, %v654
        %v656 = vpop.f32.mrf.mxu0
        %v657 = vadd.f32 %v425, %v656
        %658 = vmatmul.bf16.gmra.mxu0 %v569
        %v659 = vpop.f32.mrf.mxu0
        %v660 = vadd.f32 %v425, %v659
        %v661 = vpop.f32.mrf.mxu0
        %v662 = vadd.f32 %v425, %v661
        %663 = vdwg.mxu0
        %v664 = vxor.u32 %v585, 2147483648
        %v665 = vxor.u32 %v587, 2147483648
        %v666 = vxor.u32 %v590, 2147483648
        %v667 = vxor.u32 %v592, 2147483648
        %v668 = vxor.u32 %v595, 2147483648
        %v669 = vxor.u32 %v597, 2147483648
        %v670 = vxor.u32 %v600, 2147483648
        %v671 = vxor.u32 %v602, 2147483648
        %v672 = vxor.u32 %v605, 2147483648
        %v673 = vxor.u32 %v607, 2147483648
        %v674 = vxor.u32 %v610, 2147483648
        %v675 = vxor.u32 %v612, 2147483648
        %v676 = vxor.u32 %v615, 2147483648
        %v677 = vxor.u32 %v617, 2147483648
        %v678 = vxor.u32 %v620, 2147483648
        %v679 = vxor.u32 %v622, 2147483648
        %v680 = vxor.u32 %v625, 2147483648
        %v681 = vxor.u32 %v627, 2147483648
        %v682 = vxor.u32 %v630, 2147483648
        %v683 = vxor.u32 %v632, 2147483648
        %v684 = vxor.u32 %v635, 2147483648
        %v685 = vxor.u32 %v637, 2147483648
        %v686 = vxor.u32 %v640, 2147483648
        %v687 = vxor.u32 %v642, 2147483648
        %v688 = vxor.u32 %v645, 2147483648
        %v689 = vxor.u32 %v647, 2147483648
        %v690 = vxor.u32 %v650, 2147483648
        %v691 = vxor.u32 %v652, 2147483648
        %v692 = vxor.u32 %v655, 2147483648
        %v693 = vxor.u32 %v657, 2147483648
        %v694 = vxor.u32 %v660, 2147483648
        %v695 = vxor.u32 %v662, 2147483648
        %v696 = vmul.f32 %v664, 1.442695
        %v697 = vpow.pop %v696
        %v698 = vmul.f32 %v665, 1.442695
        %v699 = vpow.pop %v698
        %v700 = vmul.f32 %v666, 1.442695
        %v701 = vpow.pop %v700
        %v702 = vmul.f32 %v667, 1.442695
        %v703 = vpow.pop %v702
        %v704 = vmul.f32 %v668, 1.442695
        %v705 = vpow.pop %v704
        %v706 = vmul.f32 %v669, 1.442695
        %v707 = vpow.pop %v706
        %v708 = vmul.f32 %v670, 1.442695
        %v709 = vpow.pop %v708
        %v710 = vmul.f32 %v671, 1.442695
        %v711 = vpow.pop %v710
        %v712 = vmul.f32 %v672, 1.442695
        %v713 = vpow.pop %v712
        %v714 = vmul.f32 %v673, 1.442695
        %v715 = vpow.pop %v714
        %v716 = vmul.f32 %v674, 1.442695
        %v717 = vpow.pop %v716
        %v718 = vmul.f32 %v675, 1.442695
        %v719 = vpow.pop %v718
        %v720 = vmul.f32 %v676, 1.442695
        %v721 = vpow.pop %v720
        %v722 = vmul.f32 %v677, 1.442695
        %v723 = vpow.pop %v722
        %v724 = vmul.f32 %v678, 1.442695
        %v725 = vpow.pop %v724
        %v726 = vmul.f32 %v679, 1.442695
        %v727 = vpow.pop %v726
        %v728 = vmul.f32 %v680, 1.442695
        %v729 = vpow.pop %v728
        %v730 = vmul.f32 %v681, 1.442695
        %v731 = vpow.pop %v730
        %v732 = vmul.f32 %v682, 1.442695
        %v733 = vpow.pop %v732
        %v734 = vmul.f32 %v683, 1.442695
        %v735 = vpow.pop %v734
        %v736 = vmul.f32 %v684, 1.442695
        %v737 = vpow.pop %v736
        %v738 = vmul.f32 %v685, 1.442695
        %v739 = vpow.pop %v738
        %v740 = vmul.f32 %v686, 1.442695
        %v741 = vpow.pop %v740
        %v742 = vmul.f32 %v687, 1.442695
        %v743 = vpow.pop %v742
        %v744 = vmul.f32 %v688, 1.442695
        %v745 = vpow.pop %v744
        %v746 = vmul.f32 %v689, 1.442695
        %v747 = vpow.pop %v746
        %v748 = vmul.f32 %v690, 1.442695
        %v749 = vpow.pop %v748
        %v750 = vmul.f32 %v691, 1.442695
        %v751 = vpow.pop %v750
        %v752 = vmul.f32 %v692, 1.442695
        %v753 = vpow.pop %v752
        %v754 = vmul.f32 %v693, 1.442695
        %v755 = vpow.pop %v754
        %v756 = vmul.f32 %v694, 1.442695
        %v757 = vpow.pop %v756
        %v758 = vmul.f32 %v695, 1.442695
        %v759 = vpow.pop %v758
        %v760 = vadd.f32 %v697, 1.0
        %v761 = vadd.f32 %v699, 1.0
        %v762 = vadd.f32 %v701, 1.0
        %v763 = vadd.f32 %v703, 1.0
        %v764 = vadd.f32 %v705, 1.0
        %v765 = vadd.f32 %v707, 1.0
        %v766 = vadd.f32 %v709, 1.0
        %v767 = vadd.f32 %v711, 1.0
        %v768 = vadd.f32 %v713, 1.0
        %v769 = vadd.f32 %v715, 1.0
        %v770 = vadd.f32 %v717, 1.0
        %v771 = vadd.f32 %v719, 1.0
        %v772 = vadd.f32 %v721, 1.0
        %v773 = vadd.f32 %v723, 1.0
        %v774 = vadd.f32 %v725, 1.0
        %v775 = vadd.f32 %v727, 1.0
        %v776 = vadd.f32 %v729, 1.0
        %v777 = vadd.f32 %v731, 1.0
        %v778 = vadd.f32 %v733, 1.0
        %v779 = vadd.f32 %v735, 1.0
        %v780 = vadd.f32 %v737, 1.0
        %v781 = vadd.f32 %v739, 1.0
        %v782 = vadd.f32 %v741, 1.0
        %v783 = vadd.f32 %v743, 1.0
        %v784 = vadd.f32 %v745, 1.0
        %v785 = vadd.f32 %v747, 1.0
        %v786 = vadd.f32 %v749, 1.0
        %v787 = vadd.f32 %v751, 1.0
        %v788 = vadd.f32 %v753, 1.0
        %v789 = vadd.f32 %v755, 1.0
        %v790 = vadd.f32 %v757, 1.0
        %v791 = vadd.f32 %v759, 1.0
        %v792 = vrcp.pop %v760
        %v793 = vmul.f32 %v760, %v792
        %v794 = vsub.f32 1.0, %v793
        %v795 = vmul.f32 %v792, %v794
        %v796 = vadd.f32 %v792, %v795
        %vm797 = vweird.f32 %v760
        %vm798 = vweird.f32 %v792
        %vm799 = vmor %vm797, %vm798
        %v800 = vsel %vm799, %v792, %v796
        %v801 = vand.u32 2147483647, %v760
        %vm802 = vcmp.eq.f32.partialorder %v801, 8.507059e+37
        %v803 = vand.u32 %v760, 2147483648
        %v804 = vor.u32 1.1754944e-38, %v803
        %v805 = vsel %vm802, %v804, %v800
        %v806 = vmul.f32 1.0, %v805
        %v807 = vrcp.pop %v761
        %v808 = vmul.f32 %v761, %v807
        %v809 = vsub.f32 1.0, %v808
        %v810 = vmul.f32 %v807, %v809
        %v811 = vadd.f32 %v807, %v810
        %vm812 = vweird.f32 %v761
        %vm813 = vweird.f32 %v807
        %vm814 = vmor %vm812, %vm813
        %v815 = vsel %vm814, %v807, %v811
        %v816 = vand.u32 2147483647, %v761
        %vm817 = vcmp.eq.f32.partialorder %v816, 8.507059e+37
        %v818 = vand.u32 %v761, 2147483648
        %v819 = vor.u32 1.1754944e-38, %v818
        %v820 = vsel %vm817, %v819, %v815
        %v821 = vmul.f32 1.0, %v820
        %v822 = vrcp.pop %v762
        %v823 = vmul.f32 %v762, %v822
        %v824 = vsub.f32 1.0, %v823
        %v825 = vmul.f32 %v822, %v824
        %v826 = vadd.f32 %v822, %v825
        %vm827 = vweird.f32 %v762
        %vm828 = vweird.f32 %v822
        %vm829 = vmor %vm827, %vm828
        %v830 = vsel %vm829, %v822, %v826
        %v831 = vand.u32 2147483647, %v762
        %vm832 = vcmp.eq.f32.partialorder %v831, 8.507059e+37
        %v833 = vand.u32 %v762, 2147483648
        %v834 = vor.u32 1.1754944e-38, %v833
        %v835 = vsel %vm832, %v834, %v830
        %v836 = vmul.f32 1.0, %v835
        %v837 = vrcp.pop %v763
        %v838 = vmul.f32 %v763, %v837
        %v839 = vsub.f32 1.0, %v838
        %v840 = vmul.f32 %v837, %v839
        %v841 = vadd.f32 %v837, %v840
        %vm842 = vweird.f32 %v763
        %vm843 = vweird.f32 %v837
        %vm844 = vmor %vm842, %vm843
        %v845 = vsel %vm844, %v837, %v841
        %v846 = vand.u32 2147483647, %v763
        %vm847 = vcmp.eq.f32.partialorder %v846, 8.507059e+37
        %v848 = vand.u32 %v763, 2147483648
        %v849 = vor.u32 1.1754944e-38, %v848
        %v850 = vsel %vm847, %v849, %v845
        %v851 = vmul.f32 1.0, %v850
        %v852 = vrcp.pop %v764
        %v853 = vmul.f32 %v764, %v852
        %v854 = vsub.f32 1.0, %v853
        %v855 = vmul.f32 %v852, %v854
        %v856 = vadd.f32 %v852, %v855
        %vm857 = vweird.f32 %v764
        %vm858 = vweird.f32 %v852
        %vm859 = vmor %vm857, %vm858
        %v860 = vsel %vm859, %v852, %v856
        %v861 = vand.u32 2147483647, %v764
        %vm862 = vcmp.eq.f32.partialorder %v861, 8.507059e+37
        %v863 = vand.u32 %v764, 2147483648
        %v864 = vor.u32 1.1754944e-38, %v863
        %v865 = vsel %vm862, %v864, %v860
        %v866 = vmul.f32 1.0, %v865
        %v867 = vrcp.pop %v765
        %v868 = vmul.f32 %v765, %v867
        %v869 = vsub.f32 1.0, %v868
        %v870 = vmul.f32 %v867, %v869
        %v871 = vadd.f32 %v867, %v870
        %vm872 = vweird.f32 %v765
        %vm873 = vweird.f32 %v867
        %vm874 = vmor %vm872, %vm873
        %v875 = vsel %vm874, %v867, %v871
        %v876 = vand.u32 2147483647, %v765
        %vm877 = vcmp.eq.f32.partialorder %v876, 8.507059e+37
        %v878 = vand.u32 %v765, 2147483648
        %v879 = vor.u32 1.1754944e-38, %v878
        %v880 = vsel %vm877, %v879, %v875
        %v881 = vmul.f32 1.0, %v880
        %v882 = vrcp.pop %v766
        %v883 = vmul.f32 %v766, %v882
        %v884 = vsub.f32 1.0, %v883
        %v885 = vmul.f32 %v882, %v884
        %v886 = vadd.f32 %v882, %v885
        %vm887 = vweird.f32 %v766
        %vm888 = vweird.f32 %v882
        %vm889 = vmor %vm887, %vm888
        %v890 = vsel %vm889, %v882, %v886
        %v891 = vand.u32 2147483647, %v766
        %vm892 = vcmp.eq.f32.partialorder %v891, 8.507059e+37
        %v893 = vand.u32 %v766, 2147483648
        %v894 = vor.u32 1.1754944e-38, %v893
        %v895 = vsel %vm892, %v894, %v890
        %v896 = vmul.f32 1.0, %v895
        %v897 = vrcp.pop %v767
        %v898 = vmul.f32 %v767, %v897
        %v899 = vsub.f32 1.0, %v898
        %v900 = vmul.f32 %v897, %v899
        %v901 = vadd.f32 %v897, %v900
        %vm902 = vweird.f32 %v767
        %vm903 = vweird.f32 %v897
        %vm904 = vmor %vm902, %vm903
        %v905 = vsel %vm904, %v897, %v901
        %v906 = vand.u32 2147483647, %v767
        %vm907 = vcmp.eq.f32.partialorder %v906, 8.507059e+37
        %v908 = vand.u32 %v767, 2147483648
        %v909 = vor.u32 1.1754944e-38, %v908
        %v910 = vsel %vm907, %v909, %v905
        %v911 = vmul.f32 1.0, %v910
        %v912 = vrcp.pop %v768
        %v913 = vmul.f32 %v768, %v912
        %v914 = vsub.f32 1.0, %v913
        %v915 = vmul.f32 %v912, %v914
        %v916 = vadd.f32 %v912, %v915
        %vm917 = vweird.f32 %v768
        %vm918 = vweird.f32 %v912
        %vm919 = vmor %vm917, %vm918
        %v920 = vsel %vm919, %v912, %v916
        %v921 = vand.u32 2147483647, %v768
        %vm922 = vcmp.eq.f32.partialorder %v921, 8.507059e+37
        %v923 = vand.u32 %v768, 2147483648
        %v924 = vor.u32 1.1754944e-38, %v923
        %v925 = vsel %vm922, %v924, %v920
        %v926 = vmul.f32 1.0, %v925
        %v927 = vrcp.pop %v769
        %v928 = vmul.f32 %v769, %v927
        %v929 = vsub.f32 1.0, %v928
        %v930 = vmul.f32 %v927, %v929
        %v931 = vadd.f32 %v927, %v930
        %vm932 = vweird.f32 %v769
        %vm933 = vweird.f32 %v927
        %vm934 = vmor %vm932, %vm933
        %v935 = vsel %vm934, %v927, %v931
        %v936 = vand.u32 2147483647, %v769
        %vm937 = vcmp.eq.f32.partialorder %v936, 8.507059e+37
        %v938 = vand.u32 %v769, 2147483648
        %v939 = vor.u32 1.1754944e-38, %v938
        %v940 = vsel %vm937, %v939, %v935
        %v941 = vmul.f32 1.0, %v940
        %v942 = vrcp.pop %v770
        %v943 = vmul.f32 %v770, %v942
        %v944 = vsub.f32 1.0, %v943
        %v945 = vmul.f32 %v942, %v944
        %v946 = vadd.f32 %v942, %v945
        %vm947 = vweird.f32 %v770
        %vm948 = vweird.f32 %v942
        %vm949 = vmor %vm947, %vm948
        %v950 = vsel %vm949, %v942, %v946
        %v951 = vand.u32 2147483647, %v770
        %vm952 = vcmp.eq.f32.partialorder %v951, 8.507059e+37
        %v953 = vand.u32 %v770, 2147483648
        %v954 = vor.u32 1.1754944e-38, %v953
        %v955 = vsel %vm952, %v954, %v950
        %v956 = vmul.f32 1.0, %v955
        %v957 = vrcp.pop %v771
        %v958 = vmul.f32 %v771, %v957
        %v959 = vsub.f32 1.0, %v958
        %v960 = vmul.f32 %v957, %v959
        %v961 = vadd.f32 %v957, %v960
        %vm962 = vweird.f32 %v771
        %vm963 = vweird.f32 %v957
        %vm964 = vmor %vm962, %vm963
        %v965 = vsel %vm964, %v957, %v961
        %v966 = vand.u32 2147483647, %v771
        %vm967 = vcmp.eq.f32.partialorder %v966, 8.507059e+37
        %v968 = vand.u32 %v771, 2147483648
        %v969 = vor.u32 1.1754944e-38, %v968
        %v970 = vsel %vm967, %v969, %v965
        %v971 = vmul.f32 1.0, %v970
        %v972 = vrcp.pop %v772
        %v973 = vmul.f32 %v772, %v972
        %v974 = vsub.f32 1.0, %v973
        %v975 = vmul.f32 %v972, %v974
        %v976 = vadd.f32 %v972, %v975
        %vm977 = vweird.f32 %v772
        %vm978 = vweird.f32 %v972
        %vm979 = vmor %vm977, %vm978
        %v980 = vsel %vm979, %v972, %v976
        %v981 = vand.u32 2147483647, %v772
        %vm982 = vcmp.eq.f32.partialorder %v981, 8.507059e+37
        %v983 = vand.u32 %v772, 2147483648
        %v984 = vor.u32 1.1754944e-38, %v983
        %v985 = vsel %vm982, %v984, %v980
        %v986 = vmul.f32 1.0, %v985
        %v987 = vrcp.pop %v773
        %v988 = vmul.f32 %v773, %v987
        %v989 = vsub.f32 1.0, %v988
        %v990 = vmul.f32 %v987, %v989
        %v991 = vadd.f32 %v987, %v990
        %vm992 = vweird.f32 %v773
        %vm993 = vweird.f32 %v987
        %vm994 = vmor %vm992, %vm993
        %v995 = vsel %vm994, %v987, %v991
        %v996 = vand.u32 2147483647, %v773
        %vm997 = vcmp.eq.f32.partialorder %v996, 8.507059e+37
        %v998 = vand.u32 %v773, 2147483648
        %v999 = vor.u32 1.1754944e-38, %v998
        %v1000 = vsel %vm997, %v999, %v995
        %v1001 = vmul.f32 1.0, %v1000
        %v1002 = vrcp.pop %v774
        %v1003 = vmul.f32 %v774, %v1002
        %v1004 = vsub.f32 1.0, %v1003
        %v1005 = vmul.f32 %v1002, %v1004
        %v1006 = vadd.f32 %v1002, %v1005
        %vm1007 = vweird.f32 %v774
        %vm1008 = vweird.f32 %v1002
        %vm1009 = vmor %vm1007, %vm1008
        %v1010 = vsel %vm1009, %v1002, %v1006
        %v1011 = vand.u32 2147483647, %v774
        %vm1012 = vcmp.eq.f32.partialorder %v1011, 8.507059e+37
        %v1013 = vand.u32 %v774, 2147483648
        %v1014 = vor.u32 1.1754944e-38, %v1013
        %v1015 = vsel %vm1012, %v1014, %v1010
        %v1016 = vmul.f32 1.0, %v1015
        %v1017 = vrcp.pop %v775
        %v1018 = vmul.f32 %v775, %v1017
        %v1019 = vsub.f32 1.0, %v1018
        %v1020 = vmul.f32 %v1017, %v1019
        %v1021 = vadd.f32 %v1017, %v1020
        %vm1022 = vweird.f32 %v775
        %vm1023 = vweird.f32 %v1017
        %vm1024 = vmor %vm1022, %vm1023
        %v1025 = vsel %vm1024, %v1017, %v1021
        %v1026 = vand.u32 2147483647, %v775
        %vm1027 = vcmp.eq.f32.partialorder %v1026, 8.507059e+37
        %v1028 = vand.u32 %v775, 2147483648
        %v1029 = vor.u32 1.1754944e-38, %v1028
        %v1030 = vsel %vm1027, %v1029, %v1025
        %v1031 = vmul.f32 1.0, %v1030
        %v1032 = vrcp.pop %v776
        %v1033 = vmul.f32 %v776, %v1032
        %v1034 = vsub.f32 1.0, %v1033
        %v1035 = vmul.f32 %v1032, %v1034
        %v1036 = vadd.f32 %v1032, %v1035
        %vm1037 = vweird.f32 %v776
        %vm1038 = vweird.f32 %v1032
        %vm1039 = vmor %vm1037, %vm1038
        %v1040 = vsel %vm1039, %v1032, %v1036
        %v1041 = vand.u32 2147483647, %v776
        %vm1042 = vcmp.eq.f32.partialorder %v1041, 8.507059e+37
        %v1043 = vand.u32 %v776, 2147483648
        %v1044 = vor.u32 1.1754944e-38, %v1043
        %v1045 = vsel %vm1042, %v1044, %v1040
        %v1046 = vmul.f32 1.0, %v1045
        %v1047 = vrcp.pop %v777
        %v1048 = vmul.f32 %v777, %v1047
        %v1049 = vsub.f32 1.0, %v1048
        %v1050 = vmul.f32 %v1047, %v1049
        %v1051 = vadd.f32 %v1047, %v1050
        %vm1052 = vweird.f32 %v777
        %vm1053 = vweird.f32 %v1047
        %vm1054 = vmor %vm1052, %vm1053
        %v1055 = vsel %vm1054, %v1047, %v1051
        %v1056 = vand.u32 2147483647, %v777
        %vm1057 = vcmp.eq.f32.partialorder %v1056, 8.507059e+37
        %v1058 = vand.u32 %v777, 2147483648
        %v1059 = vor.u32 1.1754944e-38, %v1058
        %v1060 = vsel %vm1057, %v1059, %v1055
        %v1061 = vmul.f32 1.0, %v1060
        %v1062 = vrcp.pop %v778
        %v1063 = vmul.f32 %v778, %v1062
        %v1064 = vsub.f32 1.0, %v1063
        %v1065 = vmul.f32 %v1062, %v1064
        %v1066 = vadd.f32 %v1062, %v1065
        %vm1067 = vweird.f32 %v778
        %vm1068 = vweird.f32 %v1062
        %vm1069 = vmor %vm1067, %vm1068
        %v1070 = vsel %vm1069, %v1062, %v1066
        %v1071 = vand.u32 2147483647, %v778
        %vm1072 = vcmp.eq.f32.partialorder %v1071, 8.507059e+37
        %v1073 = vand.u32 %v778, 2147483648
        %v1074 = vor.u32 1.1754944e-38, %v1073
        %v1075 = vsel %vm1072, %v1074, %v1070
        %v1076 = vmul.f32 1.0, %v1075
        %v1077 = vrcp.pop %v779
        %v1078 = vmul.f32 %v779, %v1077
        %v1079 = vsub.f32 1.0, %v1078
        %v1080 = vmul.f32 %v1077, %v1079
        %v1081 = vadd.f32 %v1077, %v1080
        %vm1082 = vweird.f32 %v779
        %vm1083 = vweird.f32 %v1077
        %vm1084 = vmor %vm1082, %vm1083
        %v1085 = vsel %vm1084, %v1077, %v1081
        %v1086 = vand.u32 2147483647, %v779
        %vm1087 = vcmp.eq.f32.partialorder %v1086, 8.507059e+37
        %v1088 = vand.u32 %v779, 2147483648
        %v1089 = vor.u32 1.1754944e-38, %v1088
        %v1090 = vsel %vm1087, %v1089, %v1085
        %v1091 = vmul.f32 1.0, %v1090
        %v1092 = vrcp.pop %v780
        %v1093 = vmul.f32 %v780, %v1092
        %v1094 = vsub.f32 1.0, %v1093
        %v1095 = vmul.f32 %v1092, %v1094
        %v1096 = vadd.f32 %v1092, %v1095
        %vm1097 = vweird.f32 %v780
        %vm1098 = vweird.f32 %v1092
        %vm1099 = vmor %vm1097, %vm1098
        %v1100 = vsel %vm1099, %v1092, %v1096
        %v1101 = vand.u32 2147483647, %v780
        %vm1102 = vcmp.eq.f32.partialorder %v1101, 8.507059e+37
        %v1103 = vand.u32 %v780, 2147483648
        %v1104 = vor.u32 1.1754944e-38, %v1103
        %v1105 = vsel %vm1102, %v1104, %v1100
        %v1106 = vmul.f32 1.0, %v1105
        %v1107 = vrcp.pop %v781
        %v1108 = vmul.f32 %v781, %v1107
        %v1109 = vsub.f32 1.0, %v1108
        %v1110 = vmul.f32 %v1107, %v1109
        %v1111 = vadd.f32 %v1107, %v1110
        %vm1112 = vweird.f32 %v781
        %vm1113 = vweird.f32 %v1107
        %vm1114 = vmor %vm1112, %vm1113
        %v1115 = vsel %vm1114, %v1107, %v1111
        %v1116 = vand.u32 2147483647, %v781
        %vm1117 = vcmp.eq.f32.partialorder %v1116, 8.507059e+37
        %v1118 = vand.u32 %v781, 2147483648
        %v1119 = vor.u32 1.1754944e-38, %v1118
        %v1120 = vsel %vm1117, %v1119, %v1115
        %v1121 = vmul.f32 1.0, %v1120
        %v1122 = vrcp.pop %v782
        %v1123 = vmul.f32 %v782, %v1122
        %v1124 = vsub.f32 1.0, %v1123
        %v1125 = vmul.f32 %v1122, %v1124
        %v1126 = vadd.f32 %v1122, %v1125
        %vm1127 = vweird.f32 %v782
        %vm1128 = vweird.f32 %v1122
        %vm1129 = vmor %vm1127, %vm1128
        %v1130 = vsel %vm1129, %v1122, %v1126
        %v1131 = vand.u32 2147483647, %v782
        %vm1132 = vcmp.eq.f32.partialorder %v1131, 8.507059e+37
        %v1133 = vand.u32 %v782, 2147483648
        %v1134 = vor.u32 1.1754944e-38, %v1133
        %v1135 = vsel %vm1132, %v1134, %v1130
        %v1136 = vmul.f32 1.0, %v1135
        %v1137 = vrcp.pop %v783
        %v1138 = vmul.f32 %v783, %v1137
        %v1139 = vsub.f32 1.0, %v1138
        %v1140 = vmul.f32 %v1137, %v1139
        %v1141 = vadd.f32 %v1137, %v1140
        %vm1142 = vweird.f32 %v783
        %vm1143 = vweird.f32 %v1137
        %vm1144 = vmor %vm1142, %vm1143
        %v1145 = vsel %vm1144, %v1137, %v1141
        %v1146 = vand.u32 2147483647, %v783
        %vm1147 = vcmp.eq.f32.partialorder %v1146, 8.507059e+37
        %v1148 = vand.u32 %v783, 2147483648
        %v1149 = vor.u32 1.1754944e-38, %v1148
        %v1150 = vsel %vm1147, %v1149, %v1145
        %v1151 = vmul.f32 1.0, %v1150
        %v1152 = vrcp.pop %v784
        %v1153 = vmul.f32 %v784, %v1152
        %v1154 = vsub.f32 1.0, %v1153
        %v1155 = vmul.f32 %v1152, %v1154
        %v1156 = vadd.f32 %v1152, %v1155
        %vm1157 = vweird.f32 %v784
        %vm1158 = vweird.f32 %v1152
        %vm1159 = vmor %vm1157, %vm1158
        %v1160 = vsel %vm1159, %v1152, %v1156
        %v1161 = vand.u32 2147483647, %v784
        %vm1162 = vcmp.eq.f32.partialorder %v1161, 8.507059e+37
        %v1163 = vand.u32 %v784, 2147483648
        %v1164 = vor.u32 1.1754944e-38, %v1163
        %v1165 = vsel %vm1162, %v1164, %v1160
        %v1166 = vmul.f32 1.0, %v1165
        %v1167 = vrcp.pop %v785
        %v1168 = vmul.f32 %v785, %v1167
        %v1169 = vsub.f32 1.0, %v1168
        %v1170 = vmul.f32 %v1167, %v1169
        %v1171 = vadd.f32 %v1167, %v1170
        %vm1172 = vweird.f32 %v785
        %vm1173 = vweird.f32 %v1167
        %vm1174 = vmor %vm1172, %vm1173
        %v1175 = vsel %vm1174, %v1167, %v1171
        %v1176 = vand.u32 2147483647, %v785
        %vm1177 = vcmp.eq.f32.partialorder %v1176, 8.507059e+37
        %v1178 = vand.u32 %v785, 2147483648
        %v1179 = vor.u32 1.1754944e-38, %v1178
        %v1180 = vsel %vm1177, %v1179, %v1175
        %v1181 = vmul.f32 1.0, %v1180
        %v1182 = vrcp.pop %v786
        %v1183 = vmul.f32 %v786, %v1182
        %v1184 = vsub.f32 1.0, %v1183
        %v1185 = vmul.f32 %v1182, %v1184
        %v1186 = vadd.f32 %v1182, %v1185
        %vm1187 = vweird.f32 %v786
        %vm1188 = vweird.f32 %v1182
        %vm1189 = vmor %vm1187, %vm1188
        %v1190 = vsel %vm1189, %v1182, %v1186
        %v1191 = vand.u32 2147483647, %v786
        %vm1192 = vcmp.eq.f32.partialorder %v1191, 8.507059e+37
        %v1193 = vand.u32 %v786, 2147483648
        %v1194 = vor.u32 1.1754944e-38, %v1193
        %v1195 = vsel %vm1192, %v1194, %v1190
        %v1196 = vmul.f32 1.0, %v1195
        %v1197 = vrcp.pop %v787
        %v1198 = vmul.f32 %v787, %v1197
        %v1199 = vsub.f32 1.0, %v1198
        %v1200 = vmul.f32 %v1197, %v1199
        %v1201 = vadd.f32 %v1197, %v1200
        %vm1202 = vweird.f32 %v787
        %vm1203 = vweird.f32 %v1197
        %vm1204 = vmor %vm1202, %vm1203
        %v1205 = vsel %vm1204, %v1197, %v1201
        %v1206 = vand.u32 2147483647, %v787
        %vm1207 = vcmp.eq.f32.partialorder %v1206, 8.507059e+37
        %v1208 = vand.u32 %v787, 2147483648
        %v1209 = vor.u32 1.1754944e-38, %v1208
        %v1210 = vsel %vm1207, %v1209, %v1205
        %v1211 = vmul.f32 1.0, %v1210
        %v1212 = vrcp.pop %v788
        %v1213 = vmul.f32 %v788, %v1212
        %v1214 = vsub.f32 1.0, %v1213
        %v1215 = vmul.f32 %v1212, %v1214
        %v1216 = vadd.f32 %v1212, %v1215
        %vm1217 = vweird.f32 %v788
        %vm1218 = vweird.f32 %v1212
        %vm1219 = vmor %vm1217, %vm1218
        %v1220 = vsel %vm1219, %v1212, %v1216
        %v1221 = vand.u32 2147483647, %v788
        %vm1222 = vcmp.eq.f32.partialorder %v1221, 8.507059e+37
        %v1223 = vand.u32 %v788, 2147483648
        %v1224 = vor.u32 1.1754944e-38, %v1223
        %v1225 = vsel %vm1222, %v1224, %v1220
        %v1226 = vmul.f32 1.0, %v1225
        %v1227 = vrcp.pop %v789
        %v1228 = vmul.f32 %v789, %v1227
        %v1229 = vsub.f32 1.0, %v1228
        %v1230 = vmul.f32 %v1227, %v1229
        %v1231 = vadd.f32 %v1227, %v1230
        %vm1232 = vweird.f32 %v789
        %vm1233 = vweird.f32 %v1227
        %vm1234 = vmor %vm1232, %vm1233
        %v1235 = vsel %vm1234, %v1227, %v1231
        %v1236 = vand.u32 2147483647, %v789
        %vm1237 = vcmp.eq.f32.partialorder %v1236, 8.507059e+37
        %v1238 = vand.u32 %v789, 2147483648
        %v1239 = vor.u32 1.1754944e-38, %v1238
        %v1240 = vsel %vm1237, %v1239, %v1235
        %v1241 = vmul.f32 1.0, %v1240
        %v1242 = vrcp.pop %v790
        %v1243 = vmul.f32 %v790, %v1242
        %v1244 = vsub.f32 1.0, %v1243
        %v1245 = vmul.f32 %v1242, %v1244
        %v1246 = vadd.f32 %v1242, %v1245
        %vm1247 = vweird.f32 %v790
        %vm1248 = vweird.f32 %v1242
        %vm1249 = vmor %vm1247, %vm1248
        %v1250 = vsel %vm1249, %v1242, %v1246
        %v1251 = vand.u32 2147483647, %v790
        %vm1252 = vcmp.eq.f32.partialorder %v1251, 8.507059e+37
        %v1253 = vand.u32 %v790, 2147483648
        %v1254 = vor.u32 1.1754944e-38, %v1253
        %v1255 = vsel %vm1252, %v1254, %v1250
        %v1256 = vmul.f32 1.0, %v1255
        %v1257 = vrcp.pop %v791
        %v1258 = vmul.f32 %v791, %v1257
        %v1259 = vsub.f32 1.0, %v1258
        %v1260 = vmul.f32 %v1257, %v1259
        %v1261 = vadd.f32 %v1257, %v1260
        %vm1262 = vweird.f32 %v791
        %vm1263 = vweird.f32 %v1257
        %vm1264 = vmor %vm1262, %vm1263
        %v1265 = vsel %vm1264, %v1257, %v1261
        %v1266 = vand.u32 2147483647, %v791
        %vm1267 = vcmp.eq.f32.partialorder %v1266, 8.507059e+37
        %v1268 = vand.u32 %v791, 2147483648
        %v1269 = vor.u32 1.1754944e-38, %v1268
        %v1270 = vsel %vm1267, %v1269, %v1265
        %v1271 = vmul.f32 1.0, %v1270
        %v1272 = vmul.f32 %v585, %v806
        %v1273 = vmul.f32 %v587, %v821
        %v1274 = vmul.f32 %v590, %v836
        %v1275 = vmul.f32 %v592, %v851
        %v1276 = vmul.f32 %v595, %v866
        %v1277 = vmul.f32 %v597, %v881
        %v1278 = vmul.f32 %v600, %v896
        %v1279 = vmul.f32 %v602, %v911
        %v1280 = vmul.f32 %v605, %v926
        %v1281 = vmul.f32 %v607, %v941
        %v1282 = vmul.f32 %v610, %v956
        %v1283 = vmul.f32 %v612, %v971
        %v1284 = vmul.f32 %v615, %v986
        %v1285 = vmul.f32 %v617, %v1001
        %v1286 = vmul.f32 %v620, %v1016
        %v1287 = vmul.f32 %v622, %v1031
        %v1288 = vmul.f32 %v625, %v1046
        %v1289 = vmul.f32 %v627, %v1061
        %v1290 = vmul.f32 %v630, %v1076
        %v1291 = vmul.f32 %v632, %v1091
        %v1292 = vmul.f32 %v635, %v1106
        %v1293 = vmul.f32 %v637, %v1121
        %v1294 = vmul.f32 %v640, %v1136
        %v1295 = vmul.f32 %v642, %v1151
        %v1296 = vmul.f32 %v645, %v1166
        %v1297 = vmul.f32 %v647, %v1181
        %v1298 = vmul.f32 %v650, %v1196
        %v1299 = vmul.f32 %v652, %v1211
        %v1300 = vmul.f32 %v655, %v1226
        %v1301 = vmul.f32 %v657, %v1241
        %v1302 = vmul.f32 %v660, %v1256
        %v1303 = vmul.f32 %v662, %v1271
        %v1304 = vld [vmem:[#allocation2] sm:$0x3]
        %v1305 = vadd.f32 %v1272, %v1273
        %v1306 = vadd.f32 %v1305, %v1274
        %v1307 = vadd.f32 %v1306, %v1275
        %v1308 = vadd.f32 %v1307, %v1276
        %v1309 = vadd.f32 %v1308, %v1277
        %v1310 = vadd.f32 %v1309, %v1278
        %v1311 = vadd.f32 %v1310, %v1279
        %v1312 = vadd.f32 %v1311, %v1280
        %v1313 = vadd.f32 %v1312, %v1281
        %v1314 = vadd.f32 %v1313, %v1282
        %v1315 = vadd.f32 %v1314, %v1283
        %v1316 = vadd.f32 %v1315, %v1284
        %v1317 = vadd.f32 %v1316, %v1285
        %v1318 = vadd.f32 %v1317, %v1286
        %v1319 = vadd.f32 %v1318, %v1287
        %v1320 = vrot.slane %v1319, 4
        %v1321 = vadd.f32 %v1319, %v1320
        %v1322 = vrot.slane %v1321, 2
        %v1323 = vadd.f32 %v1321, %v1322
        %v1324 = vrot.slane %v1323, 1
        %v1325 = vadd.f32 %v1323, %v1324
        %v1326 = vadd.f32 %v1288, %v1289
        %v1327 = vadd.f32 %v1326, %v1290
        %v1328 = vadd.f32 %v1327, %v1291
        %v1329 = vadd.f32 %v1328, %v1292
        %v1330 = vadd.f32 %v1329, %v1293
        %v1331 = vadd.f32 %v1330, %v1294
        %v1332 = vadd.f32 %v1331, %v1295
        %v1333 = vadd.f32 %v1332, %v1296
        %v1334 = vadd.f32 %v1333, %v1297
        %v1335 = vadd.f32 %v1334, %v1298
        %v1336 = vadd.f32 %v1335, %v1299
        %v1337 = vadd.f32 %v1336, %v1300
        %v1338 = vadd.f32 %v1337, %v1301
        %v1339 = vadd.f32 %v1338, %v1302
        %v1340 = vadd.f32 %v1339, %v1303
        %v1341 = vrot.slane %v1340, 4
        %v1342 = vadd.f32 %v1340, %v1341
        %v1343 = vrot.slane %v1342, 2
        %v1344 = vadd.f32 %v1342, %v1343
        %v1345 = vrot.slane %v1344, 1
        %v1346 = vadd.f32 %v1344, %v1345
        %vm1349 = vcmask 1041409
        %v1350 = vsel %vm1349, %v1346, %v1325
        %v1352 = vadd.f32 %v1304, %v1350
        %1353 = vst [vmem:[#allocation2] sm:$0x3] %v1352
        %p1354 = scmp.eq.s32.totalorder %s17, 1
        // Predicated region
        $region86: #{tpu_custom_call.1} parent=76 // pred_check
          %p1355 = pneg %p1354
        $region87: #{tpu_custom_call.1} parent=76 // pred_check_branch
          %1357 = sbr.rel (%p1355) target = $region89
        $region88: #{tpu_custom_call.1} parent=76 // pred_region
          %v1358 = vld [vmem:[#allocation2] sm:$0x3]
          %v1359 = vmul.f32 %v1358, 0.00390625
          %v1360 = vld [vmem:[%s3] sm:$0xff]
          %v1361 = vld [vmem:[%s3 + $0x8] sm:$0xff]
          %v1362 = vld [vmem:[%s3 + $0x10] sm:$0xff]
          %v1363 = vld [vmem:[%s3 + $0x18] sm:$0xff]
          %v1364 = vld [vmem:[%s3 + $0x20] sm:$0xff]
          %v1365 = vld [vmem:[%s3 + $0x28] sm:$0xff]
          %v1366 = vld [vmem:[%s3 + $0x30] sm:$0xff]
          %v1367 = vld [vmem:[%s3 + $0x38] sm:$0xff]
          %v1368 = vld [vmem:[%s3 + $0x40] sm:$0xff]
          %v1369 = vld [vmem:[%s3 + $0x48] sm:$0xff]
          %v1370 = vld [vmem:[%s3 + $0x50] sm:$0xff]
          %v1371 = vld [vmem:[%s3 + $0x58] sm:$0xff]
          %v1372 = vld [vmem:[%s3 + $0x60] sm:$0xff]
          %v1373 = vld [vmem:[%s3 + $0x68] sm:$0xff]
          %v1374 = vld [vmem:[%s3 + $0x70] sm:$0xff]
          %v1375 = vld [vmem:[%s3 + $0x78] sm:$0xff]
          %v1376 = vld [vmem:[%s4] sm:$0x1]
          %v1378 = vperm.slane %v1376, 0
          %1380 = vmatpush.msra.mxu0 %v1375
          %1381 = vmatpush.msra.mxu0 %v1374
          %1382 = vmatpush.msra.mxu0 %v1373
          %1383 = vmatpush.msra.mxu0 %v1372
          %1384 = vmatpush.msra.mxu0 %v1371
          %1385 = vmatpush.msra.mxu0 %v1370
          %1386 = vmatpush.msra.mxu0 %v1369
          %1387 = vmatpush.msra.mxu0 %v1368
          %1388 = vmatpush.msra.mxu0 %v1367
          %1389 = vmatpush.msra.mxu0 %v1366
          %1390 = vmatpush.msra.mxu0 %v1365
          %1391 = vmatpush.msra.mxu0 %v1364
          %1392 = vmatpush.msra.mxu0 %v1363
          %1393 = vmatpush.msra.mxu0 %v1362
          %1394 = vmatpush.msra.mxu0 %v1361
          %1395 = vmatpush.msra.mxu0 %v1360
          %1396 = vmatmul.f32.gmra.mxu0 %v1359
          %v1397 = vpop.f32.mrf.mxu0
          %v1398 = vadd.f32 %v1378, %v1397
          %1399 = vdwg.mxu0
          %1400 = vst [vmem:[#allocation4] sm:$0x3] %v1398
        $region89: #{tpu_custom_call.1} parent=76 // pred_fallthru
          _
        // Predicated region
        $region90: #{tpu_custom_call.1} parent=76 // pred_check
          %p1401 = pneg %p140
        $region91: #{tpu_custom_call.1} parent=76 // pred_check_branch
          %1403 = sbr.rel (%p1401) target = $region93
        $region92: #{tpu_custom_call.1} parent=76 // pred_region
          %1405 = vsyncadd [#allocation5], 0
          %s1407 = sshll.u32 [#allocation4], 4
          %s1408 = int_to_ptr.vmem [resolvable:$true] %s1407
          %s1409 = sshll.u32 %s5, 4
          %s1410 = int_to_ptr.hbm [resolvable:$true] %s1409
          %1412 = dma.vmem_to_hbm [thread:$0]  %s1408, 32, %s1410, [#allocation5]
        $region93: #{tpu_custom_call.1} parent=76 // pred_fallthru
          _
        // Predicated region
        $region94: #{tpu_custom_call.1} parent=76 // pred_check
          %p1413 = pneg %p140
        $region95: #{tpu_custom_call.1} parent=76 // pred_check_branch
          %1415 = sbr.rel (%p1413) target = $region97
        $region96: #{tpu_custom_call.1} parent=76 // pred_region
          %1417 = dma.done [#allocation5], 32
        $region97: #{tpu_custom_call.1} parent=76 // pred_fallthru
          _
      $region77: #{tpu_custom_call.1} parent=5 // pred_fallthru
        _
      %p1418 = scmp.le.s32.totalorder 2, %s12
      // Predicated region
      $region98: #{tpu_custom_call.1} parent=5 // pred_check
        %p1419 = pneg %p1418
      $region99: #{tpu_custom_call.1} parent=5 // pred_check_branch
        %1421 = sbr.rel (%p1419) target = $region101
      $region100: #{tpu_custom_call.1} parent=5 // pred_region
        %s1422 = ssub.s32 %s12, 2
      $region101: #{tpu_custom_call.1} parent=5 // pred_fallthru
        _
    $region6: #{tpu_custom_call.1} parent=1 // loop_footer
      %s16 = sadd.s32 1, %s12
    $region7: #{tpu_custom_call.1} parent=1 // loop_footer_branch
      %11 = sbr.rel target = $region3
    $region8: #{tpu_custom_call.1} parent=1 // loop_exit
      _
    %1423 = vsyncpa [#allocation5], 1
    %s1424 = scalar_lea.sflag [#allocation5], 1
    %1425 = vsyncpa %s1424, 1

</llo_original>
